<compile_context>
chip_gen: v5e
topology: v5e:2x2
jax: 0.10.0
libtpu: 0.0.40
codegen_flags: <defaults>
</compile_context>

<pallas_src>
import functools
import math

import jax
import jax.numpy as jnp
from jax.experimental import pallas as pl
from jax.experimental.pallas import tpu as pltpu


_TOKEN_TILE = 256                      # token-dim tile for row-tiled kernels
_VMEM_LIMIT = 48 * 1024 * 1024         # explicit scoped-VMEM budget (< v7x 64 MiB)


# ----------------------------------------------------------------------------
# helpers
# ----------------------------------------------------------------------------
def _bdot(a, b):
    """MXU dot: bf16 operands (weights are already bf16), f32 accumulation."""
    return jnp.dot(a.astype(jnp.bfloat16), b, preferred_element_type=jnp.float32)


@functools.lru_cache(maxsize=None)
def _weight_spec_kwargs():
    """BlockSpec kwargs for constant-index weight operands.

    pl.Buffered(1) single-buffers weights whose block index never changes,
    halving their resident VMEM (the headroom that lets 256-row FFN tiles fit
    inside v7x's 64 MiB and v5e's 16 MiB default scoped VMEM).  Probed once on
    a tiny kernel; falls back to default double-buffering if unsupported.
    """
    def probe(w_ref, o_ref):
        o_ref[...] = w_ref[...] * 2.0

    try:
        kwargs = dict(pipeline_mode=pl.Buffered(1))
        w = jnp.ones((8, 128), jnp.float32)
        out = pl.pallas_call(
            probe,
            out_shape=jax.ShapeDtypeStruct((8, 128), jnp.float32),
            grid=(2,),
            in_specs=[pl.BlockSpec((8, 128), lambda i: (0, 0), **kwargs)],
            out_specs=pl.BlockSpec((8, 128), lambda i: (0, 0)),
            compiler_params=pltpu.CompilerParams(dimension_semantics=("arbitrary",)),
        )(w)
        jax.block_until_ready(out)
        return kwargs
    except Exception:            # any rejection => default double buffering
        return {}


# ----------------------------------------------------------------------------
# Pallas kernels
# ----------------------------------------------------------------------------
def _linear_kernel(x_ref, w_ref, b_ref, o_ref):
    o_ref[...] = _bdot(x_ref[...], w_ref[...]) + b_ref[...]


def linear(x, w_bf16, b):
    m, d = x.shape
    n = w_bf16.shape[1]
    bm = min(_TOKEN_TILE, m)
    wkw = _weight_spec_kwargs()
    return pl.pallas_call(
        _linear_kernel,
        out_shape=jax.ShapeDtypeStruct((m, n), jnp.float32),
        grid=(pl.cdiv(m, bm),),          # ragged last tile handled by Pallas
        in_specs=[
            pl.BlockSpec((bm, d), lambda i: (i, 0)),
            pl.BlockSpec((d, n), lambda i: (0, 0), **wkw),
            pl.BlockSpec((1, n), lambda i: (0, 0)),
        ],
        out_specs=pl.BlockSpec((bm, n), lambda i: (i, 0)),
        compiler_params=pltpu.CompilerParams(
            dimension_semantics=("parallel",),
            vmem_limit_bytes=_VMEM_LIMIT),
    )(x, w_bf16, b)


def _layernorm_kernel(x_ref, g_ref, b_ref, o_ref, *, eps=1e-12):
    x = x_ref[...]
    mean = jnp.mean(x, axis=-1, keepdims=True)
    var = jnp.mean((x - mean) ** 2, axis=-1, keepdims=True)
    o_ref[...] = (x - mean) * jax.lax.rsqrt(var + eps) * g_ref[...] + b_ref[...]


def layernorm(x, g, b):
    m, d = x.shape
    bm = min(_TOKEN_TILE, m)
    return pl.pallas_call(
        _layernorm_kernel,
        out_shape=jax.ShapeDtypeStruct((m, d), jnp.float32),
        grid=(pl.cdiv(m, bm),),
        in_specs=[
            pl.BlockSpec((bm, d), lambda i: (i, 0)),
            pl.BlockSpec((1, d), lambda i: (0, 0)),
            pl.BlockSpec((1, d), lambda i: (0, 0)),
        ],
        out_specs=pl.BlockSpec((bm, d), lambda i: (i, 0)),
        compiler_params=pltpu.CompilerParams(dimension_semantics=("parallel",)),
    )(x, g, b)


def _attn_layer_kernel(x_ref, maskadd_ref, wqkv_ref, bqkv_ref, wo_ref, bo_ref,
                       g_ref, beta_ref, o_ref, *, num_heads, eps=1e-12):
    """Fused: QKV proj -> per-head softmax attention -> out proj -> residual -> LN.

    1/sqrt(head_dim) is pre-folded into Wq/bq; mask is additive (0 keep / -1e30).
    """
    x = x_ref[0]                                     # (S, D) f32
    mask_add = maskadd_ref[0]                        # (1, S) f32
    d = x.shape[-1]
    hd = d // num_heads

    qkv = _bdot(x, wqkv_ref[...]) + bqkv_ref[...]    # (S, 3D) f32
    q = qkv[:, 0:d].astype(jnp.bfloat16)             # cast once, not per head
    k = qkv[:, d:2 * d].astype(jnp.bfloat16)
    v = qkv[:, 2 * d:3 * d].astype(jnp.bfloat16)

    heads = []
    for h in range(num_heads):
        sl = slice(h * hd, (h + 1) * hd)
        scores = jax.lax.dot_general(
            q[:, sl], k[:, sl], (((1,), (1,)), ((), ())),
            preferred_element_type=jnp.float32)      # (S, S)
        scores = scores + mask_add                   # single vadd masking
        m = jnp.max(scores, axis=-1, keepdims=True)
        p = jnp.exp(scores - m)
        # TODO(synk): approx reciprocal (EUP) differs slightly from exact softmax.
        p = p * pl.reciprocal(jnp.sum(p, axis=-1, keepdims=True), approx=True)
        heads.append(_bdot(p, v[:, sl]))             # (S, hd) f32

    ctx = jnp.concatenate(heads, axis=-1)            # (S, D)
    y = x + bo_ref[...] + _bdot(ctx, wo_ref[...])    # ONE K=D output-proj matmul
    mean = jnp.mean(y, axis=-1, keepdims=True)
    var = jnp.mean((y - mean) ** 2, axis=-1, keepdims=True)
    o_ref[0] = (y - mean) * jax.lax.rsqrt(var + eps) * g_ref[...] + beta_ref[...]


def attention_block(x, mask_add, w_qkv, b_qkv, wo, bo, g, beta, *, num_heads):
    b, s, d = x.shape
    wkw = _weight_spec_kwargs()
    return pl.pallas_call(
        functools.partial(_attn_layer_kernel, num_heads=num_heads),
        out_shape=jax.ShapeDtypeStruct((b, s, d), jnp.float32),
        grid=(b,),
        in_specs=[
            pl.BlockSpec((1, s, d), lambda i: (i, 0, 0)),
            pl.BlockSpec((1, 1, s), lambda i: (i, 0, 0)),
            pl.BlockSpec((d, 3 * d), lambda i: (0, 0), **wkw),
            pl.BlockSpec((1, 3 * d), lambda i: (0, 0)),
            pl.BlockSpec((d, d), lambda i: (0, 0), **wkw),
            pl.BlockSpec((1, d), lambda i: (0, 0)),
            pl.BlockSpec((1, d), lambda i: (0, 0)),
            pl.BlockSpec((1, d), lambda i: (0, 0)),
        ],
        out_specs=pl.BlockSpec((1, s, d), lambda i: (i, 0, 0)),
        compiler_params=pltpu.CompilerParams(
            dimension_semantics=("parallel",),
            vmem_limit_bytes=_VMEM_LIMIT),
    )(x, mask_add, w_qkv, b_qkv, wo, bo, g, beta)


def _ffn_ln_kernel(x_ref, w1_ref, b1_ref, w2_ref, b2_ref, g_ref, beta_ref, o_ref,
                   *, eps=1e-12):
    """Fused: w1 + GELU + w2 + residual + LayerNorm (FFN hidden never leaves VMEM)."""
    x = x_ref[...]
    h = _bdot(x, w1_ref[...]) + b1_ref[...]
    # TODO(synk): HF DistilBERT uses exact (erf) GELU; tanh-approx used for
    # Mosaic-safe lowering (tiny numeric difference).
    h = jax.nn.gelu(h, approximate=True)
    y = x + _bdot(h, w2_ref[...]) + b2_ref[...]
    mean = jnp.mean(y, axis=-1, keepdims=True)
    var = jnp.mean((y - mean) ** 2, axis=-1, keepdims=True)
    o_ref[...] = (y - mean) * jax.lax.rsqrt(var + eps) * g_ref[...] + beta_ref[...]


def ffn_block(x, w1, b1, w2, b2, g, beta):
    m, d = x.shape
    f = w1.shape[1]
    bm = min(_TOKEN_TILE, m)
    wkw = _weight_spec_kwargs()
    return pl.pallas_call(
        _ffn_ln_kernel,
        out_shape=jax.ShapeDtypeStruct((m, d), jnp.float32),
        grid=(pl.cdiv(m, bm),),
        in_specs=[
            pl.BlockSpec((bm, d), lambda i: (i, 0)),
            pl.BlockSpec((d, f), lambda i: (0, 0), **wkw),
            pl.BlockSpec((1, f), lambda i: (0, 0)),
            pl.BlockSpec((f, d), lambda i: (0, 0), **wkw),
            pl.BlockSpec((1, d), lambda i: (0, 0)),
            pl.BlockSpec((1, d), lambda i: (0, 0)),
            pl.BlockSpec((1, d), lambda i: (0, 0)),
        ],
        out_specs=pl.BlockSpec((bm, d), lambda i: (i, 0)),
        compiler_params=pltpu.CompilerParams(
            dimension_semantics=("parallel",),
            vmem_limit_bytes=_VMEM_LIMIT),
    )(x, w1, b1, w2, b2, g, beta)


def _lstm_step_kernel(gx_ref, whh_ref, wcls_ref, bcls_ref, o_ref,
                      h_sc, c_sc, acc_sc):
    """One LSTM time-step per grid iteration (grid axis T, 'arbitrary').

    gx_ref   : (1, B, 4D) f32  streamed time slice of x_t @ W_ih + (b_ih + b_hh),
                               gate order i|f|g|o (PyTorch layout)
    whh_ref  : (D, 4D)    bf16 recurrent weights, all four gates fused
    wcls_ref : (D, C)     bf16 classifier rows for this time step (streamed)
    h/c/acc  : VMEM scratch carried across grid steps
    """
    t = pl.program_id(0)
    d = whh_ref.shape[0]

    @pl.when(t == 0)
    def _():
        h_sc[...] = jnp.zeros_like(h_sc)
        c_sc[...] = jnp.zeros_like(c_sc)
        acc_sc[...] = jnp.zeros_like(acc_sc)

    # ONE (B,D)x(D,4D) recurrent matmul per step instead of four (B,D)x(D,D)
    z = gx_ref[0] + jnp.dot(h_sc[...].astype(jnp.bfloat16), whh_ref[...],
                            preferred_element_type=jnp.float32)        # (B, 4D)
    i = jax.nn.sigmoid(z[:, 0:d])
    f = jax.nn.sigmoid(z[:, d:2 * d])
    g = jnp.tanh(z[:, 2 * d:3 * d])
    o = jax.nn.sigmoid(z[:, 3 * d:4 * d])
    c = f * c_sc[...] + i * g
    h = o * jnp.tanh(c)
    c_sc[...] = c
    h_sc[...] = h

    # fused classifier: logits = sum_t h_t @ Wcls[t*D:(t+1)*D]
    acc_sc[...] += jnp.dot(h.astype(jnp.bfloat16), wcls_ref[...],
                           preferred_element_type=jnp.float32)

    @pl.when(t == pl.num_programs(0) - 1)
    def _():
        o_ref[...] = acc_sc[...] + bcls_ref[...]


def lstm_classifier(gx, w_hh, w_cls, b_cls):
    t, b, d4 = gx.shape
    d = d4 // 4
    nclass = w_cls.shape[1]
    wkw = _weight_spec_kwargs()
    return pl.pallas_call(
        _lstm_step_kernel,
        out_shape=jax.ShapeDtypeStruct((b, nclass), jnp.float32),
        grid=(t,),
        in_specs=[
            pl.BlockSpec((1, b, d4), lambda i: (i, 0, 0)),      # streamed gx slice
            pl.BlockSpec((d, d4), lambda i: (0, 0), **wkw),     # resident W_hh
            pl.BlockSpec((d, nclass), lambda i: (i, 0)),        # per-step Wcls rows
            pl.BlockSpec((1, nclass), lambda i: (0, 0)),
        ],
        out_specs=pl.BlockSpec((b, nclass), lambda i: (0, 0)),  # resident accumulator slot
        scratch_shapes=[
            pltpu.VMEM((b, d), jnp.float32),        # h_t
            pltpu.VMEM((b, d), jnp.float32),        # c_t
            pltpu.VMEM((b, nclass), jnp.float32),   # classifier accumulator
        ],
        compiler_params=pltpu.CompilerParams(
            dimension_semantics=("arbitrary",),     # serial recurrence
            vmem_limit_bytes=_VMEM_LIMIT),
    )(gx, w_hh, w_cls, b_cls)


# ----------------------------------------------------------------------------
# Model definition (deterministic synthetic weights — no checkpoint loading)
# ----------------------------------------------------------------------------
CFG = dict(vocab=50, max_pos=16, d=32, heads=4, ffn=64, layers=2,
           batch=2, seq=9, nclass=3)


def init_params(key, cfg):
    keys = list(jax.random.split(key, 128))
    kit = iter(keys)

    def rnd(shape, scale=0.02):
        return scale * jax.random.normal(next(kit), shape, jnp.float32)

    d, f = cfg["d"], cfg["ffn"]
    t = cfg["seq"] - 1
    params = {
        "word_emb": rnd((cfg["vocab"], d)),
        "pos_emb": rnd((cfg["max_pos"], d)),
        "emb_ln_g": jnp.ones((1, d), jnp.float32),
        "emb_ln_b": jnp.zeros((1, d), jnp.float32),
        "layers": [],
        # LSTM (PyTorch gate order i|f|g|o; weights pre-transposed to (in, 4*hidden))
        "w_ih": rnd((d, 4 * d)), "b_ih": rnd((1, 4 * d)),
        "w_hh": rnd((d, 4 * d)), "b_hh": rnd((1, 4 * d)),
        # classifier: in_features = hidden * (seq - 1), rows time-major
        "w_cls": rnd((d * t, cfg["nclass"])), "b_cls": rnd((1, cfg["nclass"])),
    }
    for _ in range(cfg["layers"]):
        params["layers"].append({
            "w_qkv": rnd((d, 3 * d)), "b_qkv": rnd((1, 3 * d)),   # fused Q|K|V
            "wo": rnd((d, d)), "bo": rnd((1, d)),
            "ln1_g": jnp.ones((1, d), jnp.float32), "ln1_b": jnp.zeros((1, d), jnp.float32),
            "w1": rnd((d, f)), "b1": rnd((1, f)),
            "w2": rnd((f, d)), "b2": rnd((1, d)),
            "ln2_g": jnp.ones((1, d), jnp.float32), "ln2_b": jnp.zeros((1, d), jnp.float32),
        })
    return params


def prepare_params(raw, cfg):
    """One-time weight prep: fold 1/sqrt(head_dim) into Wq/bq, fold the two
    LSTM biases together, and cast every matmul weight to bf16 ONCE (no
    per-forward .astype HBM traffic inside the jitted graph)."""
    d, h = cfg["d"], cfg["heads"]
    scale = 1.0 / math.sqrt(d // h)
    prep = {
        "word_emb": raw["word_emb"], "pos_emb": raw["pos_emb"],
        "emb_ln_g": raw["emb_ln_g"], "emb_ln_b": raw["emb_ln_b"],
        "layers": [],
        "w_ih": raw["w_ih"].astype(jnp.bfloat16),
        "b_gates": raw["b_ih"] + raw["b_hh"],
        "w_hh": raw["w_hh"].astype(jnp.bfloat16),
        "w_cls": raw["w_cls"].astype(jnp.bfloat16),
        "b_cls": raw["b_cls"],
    }
    for lp in raw["layers"]:
        prep["layers"].append({
            "w_qkv": lp["w_qkv"].at[:, :d].multiply(scale).astype(jnp.bfloat16),
            "b_qkv": lp["b_qkv"].at[:, :d].multiply(scale),
            "wo": lp["wo"].astype(jnp.bfloat16), "bo": lp["bo"],
            "ln1_g": lp["ln1_g"], "ln1_b": lp["ln1_b"],
            "w1": lp["w1"].astype(jnp.bfloat16), "b1": lp["b1"],
            "w2": lp["w2"].astype(jnp.bfloat16), "b2": lp["b2"],
            "ln2_g": lp["ln2_g"], "ln2_b": lp["ln2_b"],
        })
    return prep


def distil_bert_lstm_forward(params, input_ids, attention_mask, cfg):
    b, s = input_ids.shape
    d, h = cfg["d"], cfg["heads"]

    # --- DistilBERT embeddings (gather is XLA glue; norm is a Pallas kernel) ---
    x = params["word_emb"][input_ids] + params["pos_emb"][jnp.arange(s)][None, :, :]
    x = layernorm(x.reshape(b * s, d), params["emb_ln_g"], params["emb_ln_b"])
    x = x.reshape(b, s, d)

    # additive key mask: 0 keep, -1e30 masked (single vadd inside the kernel)
    mask_add = (attention_mask.astype(jnp.float32) - 1.0).reshape(b, 1, s) * 1e30

    # --- transformer layers: 2 fused pallas_calls per layer ---
    for lp in params["layers"]:
        x = attention_block(x, mask_add, lp["w_qkv"], lp["b_qkv"], lp["wo"], lp["bo"],
                            lp["ln1_g"], lp["ln1_b"], num_heads=h)
        x = ffn_block(x.reshape(b * s, d), lp["w1"], lp["b1"],
                      lp["w2"], lp["b2"], lp["ln2_g"], lp["ln2_b"]).reshape(b, s, d)

    # --- drop [CLS]; go time-major BEFORE the 4x-wider gate projection so the
    # big (T, B, 4D) gx slab never needs an HBM transpose ---
    t = s - 1
    pooler_tbd = jnp.transpose(x[:, 1:], (1, 0, 2))            # (T, B, D), small XLA transpose
    gx = linear(pooler_tbd.reshape(t * b, d), params["w_ih"], params["b_gates"])
    gx = gx.reshape(t, b, 4 * d)                                # free reshape, gates i|f|g|o

    # --- streaming single-kernel LSTM recurrence + fused classifier ---
    return lstm_classifier(gx, params["w_hh"], params["w_cls"], params["b_cls"])


# ----------------------------------------------------------------------------
if __name__ == "__main__":
    cfg = CFG
    key = jax.random.PRNGKey(0)
    k_param, k_ids = jax.random.split(key)

    params = prepare_params(init_params(k_param, cfg), cfg)

    b, s = cfg["batch"], cfg["seq"]
    input_ids = jax.random.randint(k_ids, (b, s), 0, cfg["vocab"], dtype=jnp.int32)
    attention_mask = jnp.ones((b, s), jnp.int32).at[1, -2:].set(0)   # some padding

    _weight_spec_kwargs()   # probe Buffered(1) support once, outside jit

    fwd = jax.jit(functools.partial(distil_bert_lstm_forward, cfg=cfg))
    out = fwd(params, input_ids, attention_mask)
    jax.block_until_ready(out)
    assert out.shape == (b, cfg["nclass"]) and out.dtype == jnp.float32
    print("KERNEL_OK")
</pallas_src>

<mosaic_0001>
module attributes {stable_mosaic.version = 11 : i64} {
  func.func @probe(%arg0: i32, %arg1: memref<8x128xf32, #tpu.memory_space<vmem>>, %arg2: memref<8x128xf32, #tpu.memory_space<vmem>>) attributes {dimension_semantics = [#tpu.dimension_semantics<arbitrary>], iteration_bounds = array<i64: 2>, scalar_prefetch = 0 : i64, scratch_operands = 0 : i64, tpu.core_type = #tpu.core_type<tc>, window_params = [{pipeline_mode = #tpu.pipeline_mode<synchronous>, transform_indices = @transform_0, window_bounds = array<i64: 8, 128>}, {pipeline_mode = #tpu.pipeline_mode<synchronous>, transform_indices = @transform_1, window_bounds = array<i64: 8, 128>}]} {
    %c0 = arith.constant 0 : index
    %c0_0 = arith.constant 0 : index
    %0 = vector.load %arg1[%c0, %c0_0] : memref<8x128xf32, #tpu.memory_space<vmem>>, vector<8x128xf32>
    %cst = arith.constant 2.000000e+00 : f32
    %1 = vector.broadcast %cst : f32 to vector<8x128xf32>
    %2 = arith.mulf %0, %1 : vector<8x128xf32>
    %c0_1 = arith.constant 0 : index
    %c0_2 = arith.constant 0 : index
    %3 = vector.load %arg2[%c0_1, %c0_2] : memref<8x128xf32, #tpu.memory_space<vmem>>, vector<8x128xf32>
    tpu.vector_store %arg2[%c0_1, %c0_2], %2 {strides = array<i32>} : memref<8x128xf32, #tpu.memory_space<vmem>>, vector<8x128xf32>,
    return
  }
  func.func @transform_0(%arg0: i32) -> (i32, i32) {
    %c0_i32 = arith.constant 0 : i32
    %c0_i32_0 = arith.constant 0 : i32
    %c0_i32_1 = arith.constant 0 : i32
    return %c0_i32, %c0_i32_0 : i32, i32
  }
  func.func @transform_1(%arg0: i32) -> (i32, i32) {
    %c0_i32 = arith.constant 0 : i32
    %c0_i32_0 = arith.constant 0 : i32
    %c0_i32_1 = arith.constant 0 : i32
    return %c0_i32, %c0_i32_0 : i32, i32
  }
}

module attributes {stable_mosaic.version = 11 : i64} {
  func.func @_attn_layer_kernel(%arg0: i32, %arg1: memref<1x9x32xf32, #tpu.memory_space<vmem>>, %arg2: memref<1x1x9xf32, #tpu.memory_space<vmem>>, %arg3: memref<32x96xbf16, #tpu.memory_space<vmem>>, %arg4: memref<1x96xf32, #tpu.memory_space<vmem>>, %arg5: memref<32x32xbf16, #tpu.memory_space<vmem>>, %arg6: memref<1x32xf32, #tpu.memory_space<vmem>>, %arg7: memref<1x32xf32, #tpu.memory_space<vmem>>, %arg8: memref<1x32xf32, #tpu.memory_space<vmem>>, %arg9: memref<1x9x32xf32, #tpu.memory_space<vmem>>) attributes {dimension_semantics = [#tpu.dimension_semantics<parallel>], iteration_bounds = array<i64: 2>, scalar_prefetch = 0 : i64, scratch_operands = 0 : i64, tpu.core_type = #tpu.core_type<tc>, window_params = [{transform_indices = @transform_0, window_bounds = array<i64: 1, 9, 32>}, {transform_indices = @transform_1, window_bounds = array<i64: 1, 1, 9>}, {pipeline_mode = #tpu.pipeline_mode<synchronous>, transform_indices = @transform_2, window_bounds = array<i64: 32, 96>}, {pipeline_mode = #tpu.pipeline_mode<synchronous>, transform_indices = @transform_3, window_bounds = array<i64: 1, 96>}, {pipeline_mode = #tpu.pipeline_mode<synchronous>, transform_indices = @transform_4, window_bounds = array<i64: 32, 32>}, {pipeline_mode = #tpu.pipeline_mode<synchronous>, transform_indices = @transform_5, window_bounds = array<i64: 1, 32>}, {pipeline_mode = #tpu.pipeline_mode<synchronous>, transform_indices = @transform_6, window_bounds = array<i64: 1, 32>}, {pipeline_mode = #tpu.pipeline_mode<synchronous>, transform_indices = @transform_7, window_bounds = array<i64: 1, 32>}, {transform_indices = @transform_8, window_bounds = array<i64: 1, 9, 32>}]} {
    %c0 = arith.constant 0 : index
    %c0_0 = arith.constant 0 : index
    %c0_1 = arith.constant 0 : index
    %0 = vector.load %arg1[%c0, %c0_0, %c0_1] : memref<1x9x32xf32, #tpu.memory_space<vmem>>, vector<1x9x32xf32>
    %1 = vector.shape_cast %0 : vector<1x9x32xf32> to vector<9x32xf32>
    %c0_2 = arith.constant 0 : index
    %c0_3 = arith.constant 0 : index
    %c0_4 = arith.constant 0 : index
    %2 = vector.load %arg2[%c0_2, %c0_3, %c0_4] : memref<1x1x9xf32, #tpu.memory_space<vmem>>, vector<1x1x9xf32>
    %3 = vector.shape_cast %2 : vector<1x1x9xf32> to vector<1x9xf32>
    %c0_5 = arith.constant 0 : index
    %c0_6 = arith.constant 0 : index
    %4 = vector.load %arg3[%c0_5, %c0_6] : memref<32x96xbf16, #tpu.memory_space<vmem>>, vector<32x96xbf16>
    %5 = arith.truncf %1 : vector<9x32xf32> to vector<9x32xbf16>
    %cst = arith.constant dense<0.000000e+00> : vector<9x96xf32>
    %6 = tpu.matmul %5, %4, %cst {dimension_numbers = #tpu.dot_dimension_numbers<[1], [0], [0], [1], [0, 0, 1, 1], [], []>} : vector<9x32xbf16>, vector<32x96xbf16>, vector<9x96xf32> -> vector<9x96xf32>
    %c0_7 = arith.constant 0 : index
    %c0_8 = arith.constant 0 : index
    %7 = vector.load %arg4[%c0_7, %c0_8] : memref<1x96xf32, #tpu.memory_space<vmem>>, vector<1x96xf32>
    %8 = vector.broadcast %7 : vector<1x96xf32> to vector<9x96xf32>
    %9 = arith.addf %6, %8 : vector<9x96xf32>
    %10 = vector.extract_strided_slice %9 {offsets = [0, 0], sizes = [9, 32], strides = [1, 1]} : vector<9x96xf32> to vector<9x32xf32>
    %11 = arith.truncf %10 : vector<9x32xf32> to vector<9x32xbf16>
    %12 = vector.extract_strided_slice %9 {offsets = [0, 32], sizes = [9, 32], strides = [1, 1]} : vector<9x96xf32> to vector<9x32xf32>
    %13 = arith.truncf %12 : vector<9x32xf32> to vector<9x32xbf16>
    %14 = vector.extract_strided_slice %9 {offsets = [0, 64], sizes = [9, 32], strides = [1, 1]} : vector<9x96xf32> to vector<9x32xf32>
    %15 = arith.truncf %14 : vector<9x32xf32> to vector<9x32xbf16>
    %16 = vector.extract_strided_slice %11 {offsets = [0, 0], sizes = [9, 8], strides = [1, 1]} : vector<9x32xbf16> to vector<9x8xbf16>
    %17 = vector.extract_strided_slice %13 {offsets = [0, 0], sizes = [9, 8], strides = [1, 1]} : vector<9x32xbf16> to vector<9x8xbf16>
    %cst_9 = arith.constant dense<0.000000e+00> : vector<9x9xf32>
    %18 = tpu.matmul %16, %17, %cst_9 {dimension_numbers = #tpu.dot_dimension_numbers<[1], [1], [0], [0], [0, 0, 1, 0], [], []>} : vector<9x8xbf16>, vector<9x8xbf16>, vector<9x9xf32> -> vector<9x9xf32>
    %19 = vector.broadcast %3 : vector<1x9xf32> to vector<9x9xf32>
    %20 = arith.addf %18, %19 : vector<9x9xf32>
    %cst_10 = arith.constant dense<0xFF800000> : vector<9xf32>
    %21 = vector.multi_reduction <maximumf>, %20, %cst_10 [1] : vector<9x9xf32> to vector<9xf32>
    %22 = vector.shape_cast %21 : vector<9xf32> to vector<9x1xf32>
    %23 = vector.broadcast %22 : vector<9x1xf32> to vector<9x9xf32>
    %24 = arith.subf %20, %23 : vector<9x9xf32>
    %25 = math.exp %24 : vector<9x9xf32>
    %cst_11 = arith.constant dense<0.000000e+00> : vector<9xf32>
    %26 = vector.multi_reduction <add>, %25, %cst_11 [1] : vector<9x9xf32> to vector<9xf32>
    %27 = vector.shape_cast %26 : vector<9xf32> to vector<9x1xf32>
    %28 = tpu.reciprocal %27 {approx = true} : vector<9x1xf32> -> vector<9x1xf32>
    %29 = vector.broadcast %28 : vector<9x1xf32> to vector<9x9xf32>
    %30 = arith.mulf %25, %29 : vector<9x9xf32>
    %31 = vector.extract_strided_slice %15 {offsets = [0, 0], sizes = [9, 8], strides = [1, 1]} : vector<9x32xbf16> to vector<9x8xbf16>
    %32 = arith.truncf %30 : vector<9x9xf32> to vector<9x9xbf16>
    %cst_12 = arith.constant dense<0.000000e+00> : vector<9x8xf32>
    %33 = tpu.matmul %32, %31, %cst_12 {dimension_numbers = #tpu.dot_dimension_numbers<[1], [0], [0], [1], [0, 0, 1, 1], [], []>} : vector<9x9xbf16>, vector<9x8xbf16>, vector<9x8xf32> -> vector<9x8xf32>
    %34 = vector.extract_strided_slice %11 {offsets = [0, 8], sizes = [9, 8], strides = [1, 1]} : vector<9x32xbf16> to vector<9x8xbf16>
    %35 = vector.extract_strided_slice %13 {offsets = [0, 8], sizes = [9, 8], strides = [1, 1]} : vector<9x32xbf16> to vector<9x8xbf16>
    %cst_13 = arith.constant dense<0.000000e+00> : vector<9x9xf32>
    %36 = tpu.matmul %34, %35, %cst_13 {dimension_numbers = #tpu.dot_dimension_numbers<[1], [1], [0], [0], [0, 0, 1, 0], [], []>} : vector<9x8xbf16>, vector<9x8xbf16>, vector<9x9xf32> -> vector<9x9xf32>
    %37 = vector.broadcast %3 : vector<1x9xf32> to vector<9x9xf32>
    %38 = arith.addf %36, %37 : vector<9x9xf32>
    %cst_14 = arith.constant dense<0xFF800000> : vector<9xf32>
    %39 = vector.multi_reduction <maximumf>, %38, %cst_14 [1] : vector<9x9xf32> to vector<9xf32>
    %40 = vector.shape_cast %39 : vector<9xf32> to vector<9x1xf32>
    %41 = vector.broadcast %40 : vector<9x1xf32> to vector<9x9xf32>
    %42 = arith.subf %38, %41 : vector<9x9xf32>
    %43 = math.exp %42 : vector<9x9xf32>
    %cst_15 = arith.constant dense<0.000000e+00> : vector<9xf32>
    %44 = vector.multi_reduction <add>, %43, %cst_15 [1] : vector<9x9xf32> to vector<9xf32>
    %45 = vector.shape_cast %44 : vector<9xf32> to vector<9x1xf32>
    %46 = tpu.reciprocal %45 {approx = true} : vector<9x1xf32> -> vector<9x1xf32>
    %47 = vector.broadcast %46 : vector<9x1xf32> to vector<9x9xf32>
    %48 = arith.mulf %43, %47 : vector<9x9xf32>
    %49 = vector.extract_strided_slice %15 {offsets = [0, 8], sizes = [9, 8], strides = [1, 1]} : vector<9x32xbf16> to vector<9x8xbf16>
    %50 = arith.truncf %48 : vector<9x9xf32> to vector<9x9xbf16>
    %cst_16 = arith.constant dense<0.000000e+00> : vector<9x8xf32>
    %51 = tpu.matmul %50, %49, %cst_16 {dimension_numbers = #tpu.dot_dimension_numbers<[1], [0], [0], [1], [0, 0, 1, 1], [], []>} : vector<9x9xbf16>, vector<9x8xbf16>, vector<9x8xf32> -> vector<9x8xf32>
    %52 = vector.extract_strided_slice %11 {offsets = [0, 16], sizes = [9, 8], strides = [1, 1]} : vector<9x32xbf16> to vector<9x8xbf16>
    %53 = vector.extract_strided_slice %13 {offsets = [0, 16], sizes = [9, 8], strides = [1, 1]} : vector<9x32xbf16> to vector<9x8xbf16>
    %cst_17 = arith.constant dense<0.000000e+00> : vector<9x9xf32>
    %54 = tpu.matmul %52, %53, %cst_17 {dimension_numbers = #tpu.dot_dimension_numbers<[1], [1], [0], [0], [0, 0, 1, 0], [], []>} : vector<9x8xbf16>, vector<9x8xbf16>, vector<9x9xf32> -> vector<9x9xf32>
    %55 = vector.broadcast %3 : vector<1x9xf32> to vector<9x9xf32>
    %56 = arith.addf %54, %55 : vector<9x9xf32>
    %cst_18 = arith.constant dense<0xFF800000> : vector<9xf32>
    %57 = vector.multi_reduction <maximumf>, %56, %cst_18 [1] : vector<9x9xf32> to vector<9xf32>
    %58 = vector.shape_cast %57 : vector<9xf32> to vector<9x1xf32>
    %59 = vector.broadcast %58 : vector<9x1xf32> to vector<9x9xf32>
    %60 = arith.subf %56, %59 : vector<9x9xf32>
    %61 = math.exp %60 : vector<9x9xf32>
    %cst_19 = arith.constant dense<0.000000e+00> : vector<9xf32>
    %62 = vector.multi_reduction <add>, %61, %cst_19 [1] : vector<9x9xf32> to vector<9xf32>
    %63 = vector.shape_cast %62 : vector<9xf32> to vector<9x1xf32>
    %64 = tpu.reciprocal %63 {approx = true} : vector<9x1xf32> -> vector<9x1xf32>
    %65 = vector.broadcast %64 : vector<9x1xf32> to vector<9x9xf32>
    %66 = arith.mulf %61, %65 : vector<9x9xf32>
    %67 = vector.extract_strided_slice %15 {offsets = [0, 16], sizes = [9, 8], strides = [1, 1]} : vector<9x32xbf16> to vector<9x8xbf16>
    %68 = arith.truncf %66 : vector<9x9xf32> to vector<9x9xbf16>
    %cst_20 = arith.constant dense<0.000000e+00> : vector<9x8xf32>
    %69 = tpu.matmul %68, %67, %cst_20 {dimension_numbers = #tpu.dot_dimension_numbers<[1], [0], [0], [1], [0, 0, 1, 1], [], []>} : vector<9x9xbf16>, vector<9x8xbf16>, vector<9x8xf32> -> vector<9x8xf32>
    %70 = vector.extract_strided_slice %11 {offsets = [0, 24], sizes = [9, 8], strides = [1, 1]} : vector<9x32xbf16> to vector<9x8xbf16>
    %71 = vector.extract_strided_slice %13 {offsets = [0, 24], sizes = [9, 8], strides = [1, 1]} : vector<9x32xbf16> to vector<9x8xbf16>
    %cst_21 = arith.constant dense<0.000000e+00> : vector<9x9xf32>
    %72 = tpu.matmul %70, %71, %cst_21 {dimension_numbers = #tpu.dot_dimension_numbers<[1], [1], [0], [0], [0, 0, 1, 0], [], []>} : vector<9x8xbf16>, vector<9x8xbf16>, vector<9x9xf32> -> vector<9x9xf32>
    %73 = vector.broadcast %3 : vector<1x9xf32> to vector<9x9xf32>
    %74 = arith.addf %72, %73 : vector<9x9xf32>
    %cst_22 = arith.constant dense<0xFF800000> : vector<9xf32>
    %75 = vector.multi_reduction <maximumf>, %74, %cst_22 [1] : vector<9x9xf32> to vector<9xf32>
    %76 = vector.shape_cast %75 : vector<9xf32> to vector<9x1xf32>
    %77 = vector.broadcast %76 : vector<9x1xf32> to vector<9x9xf32>
    %78 = arith.subf %74, %77 : vector<9x9xf32>
    %79 = math.exp %78 : vector<9x9xf32>
    %cst_23 = arith.constant dense<0.000000e+00> : vector<9xf32>
    %80 = vector.multi_reduction <add>, %79, %cst_23 [1] : vector<9x9xf32> to vector<9xf32>
    %81 = vector.shape_cast %80 : vector<9xf32> to vector<9x1xf32>
    %82 = tpu.reciprocal %81 {approx = true} : vector<9x1xf32> -> vector<9x1xf32>
    %83 = vector.broadcast %82 : vector<9x1xf32> to vector<9x9xf32>
    %84 = arith.mulf %79, %83 : vector<9x9xf32>
    %85 = vector.extract_strided_slice %15 {offsets = [0, 24], sizes = [9, 8], strides = [1, 1]} : vector<9x32xbf16> to vector<9x8xbf16>
    %86 = arith.truncf %84 : vector<9x9xf32> to vector<9x9xbf16>
    %cst_24 = arith.constant dense<0.000000e+00> : vector<9x8xf32>
    %87 = tpu.matmul %86, %85, %cst_24 {dimension_numbers = #tpu.dot_dimension_numbers<[1], [0], [0], [1], [0, 0, 1, 1], [], []>} : vector<9x9xbf16>, vector<9x8xbf16>, vector<9x8xf32> -> vector<9x8xf32>
    %88 = tpu.concatenate %33, %51, %69, %87 in 1 : vector<9x8xf32>, vector<9x8xf32>, vector<9x8xf32>, vector<9x8xf32> -> vector<9x32xf32>
    %c0_25 = arith.constant 0 : index
    %c0_26 = arith.constant 0 : index
    %89 = vector.load %arg6[%c0_25, %c0_26] : memref<1x32xf32, #tpu.memory_space<vmem>>, vector<1x32xf32>
    %90 = vector.broadcast %89 : vector<1x32xf32> to vector<9x32xf32>
    %91 = arith.addf %1, %90 : vector<9x32xf32>
    %c0_27 = arith.constant 0 : index
    %c0_28 = arith.constant 0 : index
    %92 = vector.load %arg5[%c0_27, %c0_28] : memref<32x32xbf16, #tpu.memory_space<vmem>>, vector<32x32xbf16>
    %93 = arith.truncf %88 : vector<9x32xf32> to vector<9x32xbf16>
    %cst_29 = arith.constant dense<0.000000e+00> : vector<9x32xf32>
    %94 = tpu.matmul %93, %92, %cst_29 {dimension_numbers = #tpu.dot_dimension_numbers<[1], [0], [0], [1], [0, 0, 1, 1], [], []>} : vector<9x32xbf16>, vector<32x32xbf16>, vector<9x32xf32> -> vector<9x32xf32>
    %95 = arith.addf %91, %94 : vector<9x32xf32>
    %cst_30 = arith.constant dense<0.000000e+00> : vector<9xf32>
    %96 = vector.multi_reduction <add>, %95, %cst_30 [1] : vector<9x32xf32> to vector<9xf32>
    %97 = vector.shape_cast %96 : vector<9xf32> to vector<9x1xf32>
    %cst_31 = arith.constant 3.200000e+01 : f32
    %98 = vector.broadcast %cst_31 : f32 to vector<9x1xf32>
    %99 = arith.divf %97, %98 : vector<9x1xf32>
    %100 = vector.broadcast %99 : vector<9x1xf32> to vector<9x32xf32>
    %101 = arith.subf %95, %100 : vector<9x32xf32>
    %102 = arith.mulf %101, %101 : vector<9x32xf32>
    %cst_32 = arith.constant dense<0.000000e+00> : vector<9xf32>
    %103 = vector.multi_reduction <add>, %102, %cst_32 [1] : vector<9x32xf32> to vector<9xf32>
    %104 = vector.shape_cast %103 : vector<9xf32> to vector<9x1xf32>
    %cst_33 = arith.constant 3.200000e+01 : f32
    %105 = vector.broadcast %cst_33 : f32 to vector<9x1xf32>
    %106 = arith.divf %104, %105 : vector<9x1xf32>
    %107 = vector.broadcast %99 : vector<9x1xf32> to vector<9x32xf32>
    %108 = arith.subf %95, %107 : vector<9x32xf32>
    %cst_34 = arith.constant 9.99999996E-13 : f32
    %109 = vector.broadcast %cst_34 : f32 to vector<9x1xf32>
    %110 = arith.addf %106, %109 : vector<9x1xf32>
    %111 = math.rsqrt %110 : vector<9x1xf32>
    %112 = vector.broadcast %111 : vector<9x1xf32> to vector<9x32xf32>
    %113 = arith.mulf %108, %112 : vector<9x32xf32>
    %c0_35 = arith.constant 0 : index
    %c0_36 = arith.constant 0 : index
    %114 = vector.load %arg7[%c0_35, %c0_36] : memref<1x32xf32, #tpu.memory_space<vmem>>, vector<1x32xf32>
    %115 = vector.broadcast %114 : vector<1x32xf32> to vector<9x32xf32>
    %116 = arith.mulf %113, %115 : vector<9x32xf32>
    %c0_37 = arith.constant 0 : index
    %c0_38 = arith.constant 0 : index
    %117 = vector.load %arg8[%c0_37, %c0_38] : memref<1x32xf32, #tpu.memory_space<vmem>>, vector<1x32xf32>
    %118 = vector.broadcast %117 : vector<1x32xf32> to vector<9x32xf32>
    %119 = arith.addf %116, %118 : vector<9x32xf32>
    %c0_39 = arith.constant 0 : index
    %c0_40 = arith.constant 0 : index
    %c0_41 = arith.constant 0 : index
    %120 = vector.load %arg9[%c0_39, %c0_40, %c0_41] : memref<1x9x32xf32, #tpu.memory_space<vmem>>, vector<1x9x32xf32>
    %121 = vector.shape_cast %120 : vector<1x9x32xf32> to vector<9x32xf32>
    %122 = vector.shape_cast %119 : vector<9x32xf32> to vector<1x9x32xf32>
    tpu.vector_store %arg9[%c0_39, %c0_40, %c0_41], %122 {strides = array<i32>} : memref<1x9x32xf32, #tpu.memory_space<vmem>>, vector<1x9x32xf32>,
    return
  }
  func.func @transform_0(%arg0: i32) -> (i32, i32, i32) {
    %c0_i32 = arith.constant 0 : i32
    %c0_i32_0 = arith.constant 0 : i32
    %c0_i32_1 = arith.constant 0 : i32
    return %arg0, %c0_i32, %c0_i32_0 : i32, i32, i32
  }
  func.func @transform_1(%arg0: i32) -> (i32, i32, i32) {
    %c0_i32 = arith.constant 0 : i32
    %c0_i32_0 = arith.constant 0 : i32
    %c0_i32_1 = arith.constant 0 : i32
    return %arg0, %c0_i32, %c0_i32_0 : i32, i32, i32
  }
  func.func @transform_2(%arg0: i32) -> (i32, i32) {
    %c0_i32 = arith.constant 0 : i32
    %c0_i32_0 = arith.constant 0 : i32
    %c0_i32_1 = arith.constant 0 : i32
    return %c0_i32, %c0_i32_0 : i32, i32
  }
  func.func @transform_3(%arg0: i32) -> (i32, i32) {
    %c0_i32 = arith.constant 0 : i32
    %c0_i32_0 = arith.constant 0 : i32
    %c0_i32_1 = arith.constant 0 : i32
    return %c0_i32, %c0_i32_0 : i32, i32
  }
  func.func @transform_4(%arg0: i32) -> (i32, i32) {
    %c0_i32 = arith.constant 0 : i32
    %c0_i32_0 = arith.constant 0 : i32
    %c0_i32_1 = arith.constant 0 : i32
    return %c0_i32, %c0_i32_0 : i32, i32
  }
  func.func @transform_5(%arg0: i32) -> (i32, i32) {
    %c0_i32 = arith.constant 0 : i32
    %c0_i32_0 = arith.constant 0 : i32
    %c0_i32_1 = arith.constant 0 : i32
    return %c0_i32, %c0_i32_0 : i32, i32
  }
  func.func @transform_6(%arg0: i32) -> (i32, i32) {
    %c0_i32 = arith.constant 0 : i32
    %c0_i32_0 = arith.constant 0 : i32
    %c0_i32_1 = arith.constant 0 : i32
    return %c0_i32, %c0_i32_0 : i32, i32
  }
  func.func @transform_7(%arg0: i32) -> (i32, i32) {
    %c0_i32 = arith.constant 0 : i32
    %c0_i32_0 = arith.constant 0 : i32
    %c0_i32_1 = arith.constant 0 : i32
    return %c0_i32, %c0_i32_0 : i32, i32
  }
  func.func @transform_8(%arg0: i32) -> (i32, i32, i32) {
    %c0_i32 = arith.constant 0 : i32
    %c0_i32_0 = arith.constant 0 : i32
    %c0_i32_1 = arith.constant 0 : i32
    return %arg0, %c0_i32, %c0_i32_0 : i32, i32, i32
  }
}

module attributes {stable_mosaic.version = 11 : i64} {
  func.func @_layernorm_kernel(%arg0: i32, %arg1: memref<18x32xf32, #tpu.memory_space<vmem>>, %arg2: memref<1x32xf32, #tpu.memory_space<vmem>>, %arg3: memref<1x32xf32, #tpu.memory_space<vmem>>, %arg4: memref<18x32xf32, #tpu.memory_space<vmem>>) attributes {dimension_semantics = [#tpu.dimension_semantics<parallel>], iteration_bounds = array<i64: 1>, scalar_prefetch = 0 : i64, scratch_operands = 0 : i64, tpu.core_type = #tpu.core_type<tc>, window_params = [{transform_indices = @transform_0, window_bounds = array<i64: 18, 32>}, {pipeline_mode = #tpu.pipeline_mode<synchronous>, transform_indices = @transform_1, window_bounds = array<i64: 1, 32>}, {pipeline_mode = #tpu.pipeline_mode<synchronous>, transform_indices = @transform_2, window_bounds = array<i64: 1, 32>}, {transform_indices = @transform_3, window_bounds = array<i64: 18, 32>}]} {
    %c0 = arith.constant 0 : index
    %c0_0 = arith.constant 0 : index
    %0 = vector.load %arg1[%c0, %c0_0] : memref<18x32xf32, #tpu.memory_space<vmem>>, vector<18x32xf32>
    %cst = arith.constant dense<0.000000e+00> : vector<18xf32>
    %1 = vector.multi_reduction <add>, %0, %cst [1] : vector<18x32xf32> to vector<18xf32>
    %2 = vector.shape_cast %1 : vector<18xf32> to vector<18x1xf32>
    %cst_1 = arith.constant 3.200000e+01 : f32
    %3 = vector.broadcast %cst_1 : f32 to vector<18x1xf32>
    %4 = arith.divf %2, %3 : vector<18x1xf32>
    %5 = vector.broadcast %4 : vector<18x1xf32> to vector<18x32xf32>
    %6 = arith.subf %0, %5 : vector<18x32xf32>
    %7 = arith.mulf %6, %6 : vector<18x32xf32>
    %cst_2 = arith.constant dense<0.000000e+00> : vector<18xf32>
    %8 = vector.multi_reduction <add>, %7, %cst_2 [1] : vector<18x32xf32> to vector<18xf32>
    %9 = vector.shape_cast %8 : vector<18xf32> to vector<18x1xf32>
    %cst_3 = arith.constant 3.200000e+01 : f32
    %10 = vector.broadcast %cst_3 : f32 to vector<18x1xf32>
    %11 = arith.divf %9, %10 : vector<18x1xf32>
    %12 = vector.broadcast %4 : vector<18x1xf32> to vector<18x32xf32>
    %13 = arith.subf %0, %12 : vector<18x32xf32>
    %cst_4 = arith.constant 9.99999996E-13 : f32
    %14 = vector.broadcast %cst_4 : f32 to vector<18x1xf32>
    %15 = arith.addf %11, %14 : vector<18x1xf32>
    %16 = math.rsqrt %15 : vector<18x1xf32>
    %17 = vector.broadcast %16 : vector<18x1xf32> to vector<18x32xf32>
    %18 = arith.mulf %13, %17 : vector<18x32xf32>
    %c0_5 = arith.constant 0 : index
    %c0_6 = arith.constant 0 : index
    %19 = vector.load %arg2[%c0_5, %c0_6] : memref<1x32xf32, #tpu.memory_space<vmem>>, vector<1x32xf32>
    %20 = vector.broadcast %19 : vector<1x32xf32> to vector<18x32xf32>
    %21 = arith.mulf %18, %20 : vector<18x32xf32>
    %c0_7 = arith.constant 0 : index
    %c0_8 = arith.constant 0 : index
    %22 = vector.load %arg3[%c0_7, %c0_8] : memref<1x32xf32, #tpu.memory_space<vmem>>, vector<1x32xf32>
    %23 = vector.broadcast %22 : vector<1x32xf32> to vector<18x32xf32>
    %24 = arith.addf %21, %23 : vector<18x32xf32>
    %c0_9 = arith.constant 0 : index
    %c0_10 = arith.constant 0 : index
    %25 = vector.load %arg4[%c0_9, %c0_10] : memref<18x32xf32, #tpu.memory_space<vmem>>, vector<18x32xf32>
    tpu.vector_store %arg4[%c0_9, %c0_10], %24 {strides = array<i32>} : memref<18x32xf32, #tpu.memory_space<vmem>>, vector<18x32xf32>,
    return
  }
  func.func @transform_0(%arg0: i32) -> (i32, i32) {
    %c0_i32 = arith.constant 0 : i32
    %c0_i32_0 = arith.constant 0 : i32
    return %arg0, %c0_i32 : i32, i32
  }
  func.func @transform_1(%arg0: i32) -> (i32, i32) {
    %c0_i32 = arith.constant 0 : i32
    %c0_i32_0 = arith.constant 0 : i32
    %c0_i32_1 = arith.constant 0 : i32
    return %c0_i32, %c0_i32_0 : i32, i32
  }
  func.func @transform_2(%arg0: i32) -> (i32, i32) {
    %c0_i32 = arith.constant 0 : i32
    %c0_i32_0 = arith.constant 0 : i32
    %c0_i32_1 = arith.constant 0 : i32
    return %c0_i32, %c0_i32_0 : i32, i32
  }
  func.func @transform_3(%arg0: i32) -> (i32, i32) {
    %c0_i32 = arith.constant 0 : i32
    %c0_i32_0 = arith.constant 0 : i32
    return %arg0, %c0_i32 : i32, i32
  }
}

module attributes {stable_mosaic.version = 11 : i64} {
  func.func @_ffn_ln_kernel(%arg0: i32, %arg1: memref<18x32xf32, #tpu.memory_space<vmem>>, %arg2: memref<32x64xbf16, #tpu.memory_space<vmem>>, %arg3: memref<1x64xf32, #tpu.memory_space<vmem>>, %arg4: memref<64x32xbf16, #tpu.memory_space<vmem>>, %arg5: memref<1x32xf32, #tpu.memory_space<vmem>>, %arg6: memref<1x32xf32, #tpu.memory_space<vmem>>, %arg7: memref<1x32xf32, #tpu.memory_space<vmem>>, %arg8: memref<18x32xf32, #tpu.memory_space<vmem>>) attributes {dimension_semantics = [#tpu.dimension_semantics<parallel>], iteration_bounds = array<i64: 1>, scalar_prefetch = 0 : i64, scratch_operands = 0 : i64, tpu.core_type = #tpu.core_type<tc>, window_params = [{transform_indices = @transform_0, window_bounds = array<i64: 18, 32>}, {pipeline_mode = #tpu.pipeline_mode<synchronous>, transform_indices = @transform_1, window_bounds = array<i64: 32, 64>}, {pipeline_mode = #tpu.pipeline_mode<synchronous>, transform_indices = @transform_2, window_bounds = array<i64: 1, 64>}, {pipeline_mode = #tpu.pipeline_mode<synchronous>, transform_indices = @transform_3, window_bounds = array<i64: 64, 32>}, {pipeline_mode = #tpu.pipeline_mode<synchronous>, transform_indices = @transform_4, window_bounds = array<i64: 1, 32>}, {pipeline_mode = #tpu.pipeline_mode<synchronous>, transform_indices = @transform_5, window_bounds = array<i64: 1, 32>}, {pipeline_mode = #tpu.pipeline_mode<synchronous>, transform_indices = @transform_6, window_bounds = array<i64: 1, 32>}, {transform_indices = @transform_7, window_bounds = array<i64: 18, 32>}]} {
    %c0 = arith.constant 0 : index
    %c0_0 = arith.constant 0 : index
    %0 = vector.load %arg1[%c0, %c0_0] : memref<18x32xf32, #tpu.memory_space<vmem>>, vector<18x32xf32>
    %c0_1 = arith.constant 0 : index
    %c0_2 = arith.constant 0 : index
    %1 = vector.load %arg2[%c0_1, %c0_2] : memref<32x64xbf16, #tpu.memory_space<vmem>>, vector<32x64xbf16>
    %2 = arith.truncf %0 : vector<18x32xf32> to vector<18x32xbf16>
    %cst = arith.constant dense<0.000000e+00> : vector<18x64xf32>
    %3 = tpu.matmul %2, %1, %cst {dimension_numbers = #tpu.dot_dimension_numbers<[1], [0], [0], [1], [0, 0, 1, 1], [], []>} : vector<18x32xbf16>, vector<32x64xbf16>, vector<18x64xf32> -> vector<18x64xf32>
    %c0_3 = arith.constant 0 : index
    %c0_4 = arith.constant 0 : index
    %4 = vector.load %arg3[%c0_3, %c0_4] : memref<1x64xf32, #tpu.memory_space<vmem>>, vector<1x64xf32>
    %5 = vector.broadcast %4 : vector<1x64xf32> to vector<18x64xf32>
    %6 = arith.addf %3, %5 : vector<18x64xf32>
    %7 = arith.mulf %6, %6 : vector<18x64xf32>
    %8 = arith.mulf %6, %7 : vector<18x64xf32>
    %cst_5 = arith.constant 4.471500e-02 : f32
    %9 = vector.broadcast %cst_5 : f32 to vector<18x64xf32>
    %10 = arith.mulf %9, %8 : vector<18x64xf32>
    %11 = arith.addf %6, %10 : vector<18x64xf32>
    %cst_6 = arith.constant 0.797884583 : f32
    %12 = vector.broadcast %cst_6 : f32 to vector<18x64xf32>
    %13 = arith.mulf %12, %11 : vector<18x64xf32>
    %14 = math.tanh %13 : vector<18x64xf32>
    %cst_7 = arith.constant 1.000000e+00 : f32
    %15 = vector.broadcast %cst_7 : f32 to vector<18x64xf32>
    %16 = arith.addf %15, %14 : vector<18x64xf32>
    %cst_8 = arith.constant 5.000000e-01 : f32
    %17 = vector.broadcast %cst_8 : f32 to vector<18x64xf32>
    %18 = arith.mulf %17, %16 : vector<18x64xf32>
    %19 = arith.mulf %6, %18 : vector<18x64xf32>
    %c0_9 = arith.constant 0 : index
    %c0_10 = arith.constant 0 : index
    %20 = vector.load %arg4[%c0_9, %c0_10] : memref<64x32xbf16, #tpu.memory_space<vmem>>, vector<64x32xbf16>
    %21 = arith.truncf %19 : vector<18x64xf32> to vector<18x64xbf16>
    %cst_11 = arith.constant dense<0.000000e+00> : vector<18x32xf32>
    %22 = tpu.matmul %21, %20, %cst_11 {dimension_numbers = #tpu.dot_dimension_numbers<[1], [0], [0], [1], [0, 0, 1, 1], [], []>} : vector<18x64xbf16>, vector<64x32xbf16>, vector<18x32xf32> -> vector<18x32xf32>
    %23 = arith.addf %0, %22 : vector<18x32xf32>
    %c0_12 = arith.constant 0 : index
    %c0_13 = arith.constant 0 : index
    %24 = vector.load %arg5[%c0_12, %c0_13] : memref<1x32xf32, #tpu.memory_space<vmem>>, vector<1x32xf32>
    %25 = vector.broadcast %24 : vector<1x32xf32> to vector<18x32xf32>
    %26 = arith.addf %23, %25 : vector<18x32xf32>
    %cst_14 = arith.constant dense<0.000000e+00> : vector<18xf32>
    %27 = vector.multi_reduction <add>, %26, %cst_14 [1] : vector<18x32xf32> to vector<18xf32>
    %28 = vector.shape_cast %27 : vector<18xf32> to vector<18x1xf32>
    %cst_15 = arith.constant 3.200000e+01 : f32
    %29 = vector.broadcast %cst_15 : f32 to vector<18x1xf32>
    %30 = arith.divf %28, %29 : vector<18x1xf32>
    %31 = vector.broadcast %30 : vector<18x1xf32> to vector<18x32xf32>
    %32 = arith.subf %26, %31 : vector<18x32xf32>
    %33 = arith.mulf %32, %32 : vector<18x32xf32>
    %cst_16 = arith.constant dense<0.000000e+00> : vector<18xf32>
    %34 = vector.multi_reduction <add>, %33, %cst_16 [1] : vector<18x32xf32> to vector<18xf32>
    %35 = vector.shape_cast %34 : vector<18xf32> to vector<18x1xf32>
    %cst_17 = arith.constant 3.200000e+01 : f32
    %36 = vector.broadcast %cst_17 : f32 to vector<18x1xf32>
    %37 = arith.divf %35, %36 : vector<18x1xf32>
    %38 = vector.broadcast %30 : vector<18x1xf32> to vector<18x32xf32>
    %39 = arith.subf %26, %38 : vector<18x32xf32>
    %cst_18 = arith.constant 9.99999996E-13 : f32
    %40 = vector.broadcast %cst_18 : f32 to vector<18x1xf32>
    %41 = arith.addf %37, %40 : vector<18x1xf32>
    %42 = math.rsqrt %41 : vector<18x1xf32>
    %43 = vector.broadcast %42 : vector<18x1xf32> to vector<18x32xf32>
    %44 = arith.mulf %39, %43 : vector<18x32xf32>
    %c0_19 = arith.constant 0 : index
    %c0_20 = arith.constant 0 : index
    %45 = vector.load %arg6[%c0_19, %c0_20] : memref<1x32xf32, #tpu.memory_space<vmem>>, vector<1x32xf32>
    %46 = vector.broadcast %45 : vector<1x32xf32> to vector<18x32xf32>
    %47 = arith.mulf %44, %46 : vector<18x32xf32>
    %c0_21 = arith.constant 0 : index
    %c0_22 = arith.constant 0 : index
    %48 = vector.load %arg7[%c0_21, %c0_22] : memref<1x32xf32, #tpu.memory_space<vmem>>, vector<1x32xf32>
    %49 = vector.broadcast %48 : vector<1x32xf32> to vector<18x32xf32>
    %50 = arith.addf %47, %49 : vector<18x32xf32>
    %c0_23 = arith.constant 0 : index
    %c0_24 = arith.constant 0 : index
    %51 = vector.load %arg8[%c0_23, %c0_24] : memref<18x32xf32, #tpu.memory_space<vmem>>, vector<18x32xf32>
    tpu.vector_store %arg8[%c0_23, %c0_24], %50 {strides = array<i32>} : memref<18x32xf32, #tpu.memory_space<vmem>>, vector<18x32xf32>,
    return
  }
  func.func @transform_0(%arg0: i32) -> (i32, i32) {
    %c0_i32 = arith.constant 0 : i32
    %c0_i32_0 = arith.constant 0 : i32
    return %arg0, %c0_i32 : i32, i32
  }
  func.func @transform_1(%arg0: i32) -> (i32, i32) {
    %c0_i32 = arith.constant 0 : i32
    %c0_i32_0 = arith.constant 0 : i32
    %c0_i32_1 = arith.constant 0 : i32
    return %c0_i32, %c0_i32_0 : i32, i32
  }
  func.func @transform_2(%arg0: i32) -> (i32, i32) {
    %c0_i32 = arith.constant 0 : i32
    %c0_i32_0 = arith.constant 0 : i32
    %c0_i32_1 = arith.constant 0 : i32
    return %c0_i32, %c0_i32_0 : i32, i32
  }
  func.func @transform_3(%arg0: i32) -> (i32, i32) {
    %c0_i32 = arith.constant 0 : i32
    %c0_i32_0 = arith.constant 0 : i32
    %c0_i32_1 = arith.constant 0 : i32
    return %c0_i32, %c0_i32_0 : i32, i32
  }
  func.func @transform_4(%arg0: i32) -> (i32, i32) {
    %c0_i32 = arith.constant 0 : i32
    %c0_i32_0 = arith.constant 0 : i32
    %c0_i32_1 = arith.constant 0 : i32
    return %c0_i32, %c0_i32_0 : i32, i32
  }
  func.func @transform_5(%arg0: i32) -> (i32, i32) {
    %c0_i32 = arith.constant 0 : i32
    %c0_i32_0 = arith.constant 0 : i32
    %c0_i32_1 = arith.constant 0 : i32
    return %c0_i32, %c0_i32_0 : i32, i32
  }
  func.func @transform_6(%arg0: i32) -> (i32, i32) {
    %c0_i32 = arith.constant 0 : i32
    %c0_i32_0 = arith.constant 0 : i32
    %c0_i32_1 = arith.constant 0 : i32
    return %c0_i32, %c0_i32_0 : i32, i32
  }
  func.func @transform_7(%arg0: i32) -> (i32, i32) {
    %c0_i32 = arith.constant 0 : i32
    %c0_i32_0 = arith.constant 0 : i32
    return %arg0, %c0_i32 : i32, i32
  }
}

module attributes {stable_mosaic.version = 11 : i64} {
  func.func @_linear_kernel(%arg0: i32, %arg1: memref<16x32xf32, #tpu.memory_space<vmem>>, %arg2: memref<32x128xbf16, #tpu.memory_space<vmem>>, %arg3: memref<1x128xf32, #tpu.memory_space<vmem>>, %arg4: memref<16x128xf32, #tpu.memory_space<vmem>>) attributes {dimension_semantics = [#tpu.dimension_semantics<parallel>], iteration_bounds = array<i64: 1>, scalar_prefetch = 0 : i64, scratch_operands = 0 : i64, tpu.core_type = #tpu.core_type<tc>, window_params = [{transform_indices = @transform_0, window_bounds = array<i64: 16, 32>}, {pipeline_mode = #tpu.pipeline_mode<synchronous>, transform_indices = @transform_1, window_bounds = array<i64: 32, 128>}, {pipeline_mode = #tpu.pipeline_mode<synchronous>, transform_indices = @transform_2, window_bounds = array<i64: 1, 128>}, {transform_indices = @transform_3, window_bounds = array<i64: 16, 128>}]} {
    %c0 = arith.constant 0 : index
    %c0_0 = arith.constant 0 : index
    %0 = vector.load %arg1[%c0, %c0_0] : memref<16x32xf32, #tpu.memory_space<vmem>>, vector<16x32xf32>
    %c0_1 = arith.constant 0 : index
    %c0_2 = arith.constant 0 : index
    %1 = vector.load %arg2[%c0_1, %c0_2] : memref<32x128xbf16, #tpu.memory_space<vmem>>, vector<32x128xbf16>
    %2 = arith.truncf %0 : vector<16x32xf32> to vector<16x32xbf16>
    %cst = arith.constant dense<0.000000e+00> : vector<16x128xf32>
    %3 = tpu.matmul %2, %1, %cst {dimension_numbers = #tpu.dot_dimension_numbers<[1], [0], [0], [1], [0, 0, 1, 1], [], []>} : vector<16x32xbf16>, vector<32x128xbf16>, vector<16x128xf32> -> vector<16x128xf32>
    %c0_3 = arith.constant 0 : index
    %c0_4 = arith.constant 0 : index
    %4 = vector.load %arg3[%c0_3, %c0_4] : memref<1x128xf32, #tpu.memory_space<vmem>>, vector<1x128xf32>
    %5 = vector.broadcast %4 : vector<1x128xf32> to vector<16x128xf32>
    %6 = arith.addf %3, %5 : vector<16x128xf32>
    %c0_5 = arith.constant 0 : index
    %c0_6 = arith.constant 0 : index
    %7 = vector.load %arg4[%c0_5, %c0_6] : memref<16x128xf32, #tpu.memory_space<vmem>>, vector<16x128xf32>
    tpu.vector_store %arg4[%c0_5, %c0_6], %6 {strides = array<i32>} : memref<16x128xf32, #tpu.memory_space<vmem>>, vector<16x128xf32>,
    return
  }
  func.func @transform_0(%arg0: i32) -> (i32, i32) {
    %c0_i32 = arith.constant 0 : i32
    %c0_i32_0 = arith.constant 0 : i32
    return %arg0, %c0_i32 : i32, i32
  }
  func.func @transform_1(%arg0: i32) -> (i32, i32) {
    %c0_i32 = arith.constant 0 : i32
    %c0_i32_0 = arith.constant 0 : i32
    %c0_i32_1 = arith.constant 0 : i32
    return %c0_i32, %c0_i32_0 : i32, i32
  }
  func.func @transform_2(%arg0: i32) -> (i32, i32) {
    %c0_i32 = arith.constant 0 : i32
    %c0_i32_0 = arith.constant 0 : i32
    %c0_i32_1 = arith.constant 0 : i32
    return %c0_i32, %c0_i32_0 : i32, i32
  }
  func.func @transform_3(%arg0: i32) -> (i32, i32) {
    %c0_i32 = arith.constant 0 : i32
    %c0_i32_0 = arith.constant 0 : i32
    return %arg0, %c0_i32 : i32, i32
  }
}

module attributes {stable_mosaic.version = 11 : i64} {
  func.func @_lstm_step_kernel(%arg0: i32, %arg1: memref<1x2x128xf32, #tpu.memory_space<vmem>>, %arg2: memref<32x128xbf16, #tpu.memory_space<vmem>>, %arg3: memref<32x3xbf16, #tpu.memory_space<vmem>>, %arg4: memref<1x3xf32, #tpu.memory_space<vmem>>, %arg5: memref<2x3xf32, #tpu.memory_space<vmem>>, %arg6: memref<2x32xf32, #tpu.memory_space<vmem>>, %arg7: memref<2x32xf32, #tpu.memory_space<vmem>>, %arg8: memref<2x3xf32, #tpu.memory_space<vmem>>) attributes {dimension_semantics = [#tpu.dimension_semantics<arbitrary>], iteration_bounds = array<i64: 8>, scalar_prefetch = 0 : i64, scratch_operands = 3 : i64, tpu.core_type = #tpu.core_type<tc>, window_params = [{transform_indices = @transform_0, window_bounds = array<i64: 1, 2, 128>}, {pipeline_mode = #tpu.pipeline_mode<synchronous>, transform_indices = @transform_1, window_bounds = array<i64: 32, 128>}, {transform_indices = @transform_2, window_bounds = array<i64: 32, 3>}, {pipeline_mode = #tpu.pipeline_mode<synchronous>, transform_indices = @transform_3, window_bounds = array<i64: 1, 3>}, {pipeline_mode = #tpu.pipeline_mode<synchronous>, transform_indices = @transform_4, window_bounds = array<i64: 2, 3>}]} {
    %c0_i32 = arith.constant 0 : i32
    %0 = arith.cmpi eq, %arg0, %c0_i32 : i32
    %1 = arith.extui %0 : i1 to i32
    %c0_i32_0 = arith.constant 0 : i32
    %2 = arith.cmpi ne, %1, %c0_i32_0 : i32
    scf.if %2 {
      %cst_24 = arith.constant 0.000000e+00 : f32
      %47 = vector.broadcast %cst_24 : f32 to vector<2x32xf32>
      %c0_25 = arith.constant 0 : index
      %c0_26 = arith.constant 0 : index
      %48 = vector.load %arg6[%c0_25, %c0_26] : memref<2x32xf32, #tpu.memory_space<vmem>>, vector<2x32xf32>
      tpu.vector_store %arg6[%c0_25, %c0_26], %47 {strides = array<i32>} : memref<2x32xf32, #tpu.memory_space<vmem>>, vector<2x32xf32>,
      %cst_27 = arith.constant 0.000000e+00 : f32
      %49 = vector.broadcast %cst_27 : f32 to vector<2x32xf32>
      %c0_28 = arith.constant 0 : index
      %c0_29 = arith.constant 0 : index
      %50 = vector.load %arg7[%c0_28, %c0_29] : memref<2x32xf32, #tpu.memory_space<vmem>>, vector<2x32xf32>
      tpu.vector_store %arg7[%c0_28, %c0_29], %49 {strides = array<i32>} : memref<2x32xf32, #tpu.memory_space<vmem>>, vector<2x32xf32>,
      %cst_30 = arith.constant 0.000000e+00 : f32
      %51 = vector.broadcast %cst_30 : f32 to vector<2x3xf32>
      %c0_31 = arith.constant 0 : index
      %c0_32 = arith.constant 0 : index
      %52 = vector.load %arg8[%c0_31, %c0_32] : memref<2x3xf32, #tpu.memory_space<vmem>>, vector<2x3xf32>
      tpu.vector_store %arg8[%c0_31, %c0_32], %51 {strides = array<i32>} : memref<2x3xf32, #tpu.memory_space<vmem>>, vector<2x3xf32>,
    } else {
    }
    %c0 = arith.constant 0 : index
    %c0_1 = arith.constant 0 : index
    %c0_2 = arith.constant 0 : index
    %3 = vector.load %arg1[%c0, %c0_1, %c0_2] : memref<1x2x128xf32, #tpu.memory_space<vmem>>, vector<1x2x128xf32>
    %4 = vector.shape_cast %3 : vector<1x2x128xf32> to vector<2x128xf32>
    %c0_3 = arith.constant 0 : index
    %c0_4 = arith.constant 0 : index
    %5 = vector.load %arg6[%c0_3, %c0_4] : memref<2x32xf32, #tpu.memory_space<vmem>>, vector<2x32xf32>
    %6 = arith.truncf %5 : vector<2x32xf32> to vector<2x32xbf16>
    %c0_5 = arith.constant 0 : index
    %c0_6 = arith.constant 0 : index
    %7 = vector.load %arg2[%c0_5, %c0_6] : memref<32x128xbf16, #tpu.memory_space<vmem>>, vector<32x128xbf16>
    %cst = arith.constant dense<0.000000e+00> : vector<2x128xf32>
    %8 = tpu.matmul %6, %7, %cst {dimension_numbers = #tpu.dot_dimension_numbers<[1], [0], [0], [1], [0, 0, 1, 1], [], []>} : vector<2x32xbf16>, vector<32x128xbf16>, vector<2x128xf32> -> vector<2x128xf32>
    %9 = arith.addf %4, %8 : vector<2x128xf32>
    %10 = vector.extract_strided_slice %9 {offsets = [0, 0], sizes = [2, 32], strides = [1, 1]} : vector<2x128xf32> to vector<2x32xf32>
    %11 = arith.negf %10 : vector<2x32xf32>
    %12 = math.exp %11 : vector<2x32xf32>
    %cst_7 = arith.constant 1.000000e+00 : f32
    %13 = vector.broadcast %cst_7 : f32 to vector<2x32xf32>
    %14 = arith.addf %13, %12 : vector<2x32xf32>
    %15 = arith.divf %13, %14 : vector<2x32xf32>
    %16 = vector.extract_strided_slice %9 {offsets = [0, 32], sizes = [2, 32], strides = [1, 1]} : vector<2x128xf32> to vector<2x32xf32>
    %17 = arith.negf %16 : vector<2x32xf32>
    %18 = math.exp %17 : vector<2x32xf32>
    %cst_8 = arith.constant 1.000000e+00 : f32
    %19 = vector.broadcast %cst_8 : f32 to vector<2x32xf32>
    %20 = arith.addf %19, %18 : vector<2x32xf32>
    %21 = arith.divf %19, %20 : vector<2x32xf32>
    %22 = vector.extract_strided_slice %9 {offsets = [0, 64], sizes = [2, 32], strides = [1, 1]} : vector<2x128xf32> to vector<2x32xf32>
    %23 = math.tanh %22 : vector<2x32xf32>
    %24 = vector.extract_strided_slice %9 {offsets = [0, 96], sizes = [2, 32], strides = [1, 1]} : vector<2x128xf32> to vector<2x32xf32>
    %25 = arith.negf %24 : vector<2x32xf32>
    %26 = math.exp %25 : vector<2x32xf32>
    %cst_9 = arith.constant 1.000000e+00 : f32
    %27 = vector.broadcast %cst_9 : f32 to vector<2x32xf32>
    %28 = arith.addf %27, %26 : vector<2x32xf32>
    %29 = arith.divf %27, %28 : vector<2x32xf32>
    %c0_10 = arith.constant 0 : index
    %c0_11 = arith.constant 0 : index
    %30 = vector.load %arg7[%c0_10, %c0_11] : memref<2x32xf32, #tpu.memory_space<vmem>>, vector<2x32xf32>
    %31 = arith.mulf %21, %30 : vector<2x32xf32>
    %32 = arith.mulf %15, %23 : vector<2x32xf32>
    %33 = arith.addf %31, %32 : vector<2x32xf32>
    %34 = math.tanh %33 : vector<2x32xf32>
    %35 = arith.mulf %29, %34 : vector<2x32xf32>
    %c0_12 = arith.constant 0 : index
    %c0_13 = arith.constant 0 : index
    %36 = vector.load %arg7[%c0_12, %c0_13] : memref<2x32xf32, #tpu.memory_space<vmem>>, vector<2x32xf32>
    tpu.vector_store %arg7[%c0_12, %c0_13], %33 {strides = array<i32>} : memref<2x32xf32, #tpu.memory_space<vmem>>, vector<2x32xf32>,
    %c0_14 = arith.constant 0 : index
    %c0_15 = arith.constant 0 : index
    %37 = vector.load %arg6[%c0_14, %c0_15] : memref<2x32xf32, #tpu.memory_space<vmem>>, vector<2x32xf32>
    tpu.vector_store %arg6[%c0_14, %c0_15], %35 {strides = array<i32>} : memref<2x32xf32, #tpu.memory_space<vmem>>, vector<2x32xf32>,
    %c0_16 = arith.constant 0 : index
    %c0_17 = arith.constant 0 : index
    %38 = vector.load %arg8[%c0_16, %c0_17] : memref<2x3xf32, #tpu.memory_space<vmem>>, vector<2x3xf32>
    %39 = arith.truncf %35 : vector<2x32xf32> to vector<2x32xbf16>
    %c0_18 = arith.constant 0 : index
    %c0_19 = arith.constant 0 : index
    %40 = vector.load %arg3[%c0_18, %c0_19] : memref<32x3xbf16, #tpu.memory_space<vmem>>, vector<32x3xbf16>
    %cst_20 = arith.constant dense<0.000000e+00> : vector<2x3xf32>
    %41 = tpu.matmul %39, %40, %cst_20 {dimension_numbers = #tpu.dot_dimension_numbers<[1], [0], [0], [1], [0, 0, 1, 1], [], []>} : vector<2x32xbf16>, vector<32x3xbf16>, vector<2x3xf32> -> vector<2x3xf32>
    %42 = arith.addf %38, %41 : vector<2x3xf32>
    %c0_21 = arith.constant 0 : index
    %c0_22 = arith.constant 0 : index
    %43 = vector.load %arg8[%c0_21, %c0_22] : memref<2x3xf32, #tpu.memory_space<vmem>>, vector<2x3xf32>
    tpu.vector_store %arg8[%c0_21, %c0_22], %42 {strides = array<i32>} : memref<2x3xf32, #tpu.memory_space<vmem>>, vector<2x3xf32>,
    %c7_i32 = arith.constant 7 : i32
    %44 = arith.cmpi eq, %arg0, %c7_i32 : i32
    %45 = arith.extui %44 : i1 to i32
    %c0_i32_23 = arith.constant 0 : i32
    %46 = arith.cmpi ne, %45, %c0_i32_23 : i32
    scf.if %46 {
      %c0_24 = arith.constant 0 : index
      %c0_25 = arith.constant 0 : index
      %47 = vector.load %arg8[%c0_24, %c0_25] : memref<2x3xf32, #tpu.memory_space<vmem>>, vector<2x3xf32>
      %c0_26 = arith.constant 0 : index
      %c0_27 = arith.constant 0 : index
      %48 = vector.load %arg4[%c0_26, %c0_27] : memref<1x3xf32, #tpu.memory_space<vmem>>, vector<1x3xf32>
      %49 = vector.broadcast %48 : vector<1x3xf32> to vector<2x3xf32>
      %50 = arith.addf %47, %49 : vector<2x3xf32>
      %c0_28 = arith.constant 0 : index
      %c0_29 = arith.constant 0 : index
      %51 = vector.load %arg5[%c0_28, %c0_29] : memref<2x3xf32, #tpu.memory_space<vmem>>, vector<2x3xf32>
      tpu.vector_store %arg5[%c0_28, %c0_29], %50 {strides = array<i32>} : memref<2x3xf32, #tpu.memory_space<vmem>>, vector<2x3xf32>,
    } else {
    }
    return
  }
  func.func @transform_0(%arg0: i32) -> (i32, i32, i32) {
    %c0_i32 = arith.constant 0 : i32
    %c0_i32_0 = arith.constant 0 : i32
    %c0_i32_1 = arith.constant 0 : i32
    return %arg0, %c0_i32, %c0_i32_0 : i32, i32, i32
  }
  func.func @transform_1(%arg0: i32) -> (i32, i32) {
    %c0_i32 = arith.constant 0 : i32
    %c0_i32_0 = arith.constant 0 : i32
    %c0_i32_1 = arith.constant 0 : i32
    return %c0_i32, %c0_i32_0 : i32, i32
  }
  func.func @transform_2(%arg0: i32) -> (i32, i32) {
    %c0_i32 = arith.constant 0 : i32
    %c0_i32_0 = arith.constant 0 : i32
    return %arg0, %c0_i32 : i32, i32
  }
  func.func @transform_3(%arg0: i32) -> (i32, i32) {
    %c0_i32 = arith.constant 0 : i32
    %c0_i32_0 = arith.constant 0 : i32
    %c0_i32_1 = arith.constant 0 : i32
    return %c0_i32, %c0_i32_0 : i32, i32
  }
  func.func @transform_4(%arg0: i32) -> (i32, i32) {
    %c0_i32 = arith.constant 0 : i32
    %c0_i32_0 = arith.constant 0 : i32
    %c0_i32_1 = arith.constant 0 : i32
    return %c0_i32, %c0_i32_0 : i32, i32
  }
}

</mosaic_0001>

<llo_original>
// kernel: tpu_custom_call.1
$region0: #{tpu_custom_call.1}
  #allocation0 [shape = 'u32[]', space=smem, size = 0x4, offset = 0x4, fixed_abs, tag = 'smem constant byte address 0x4 - core index']
  #allocation1 [shape = 'u32[72,128]{1,0:T(1,128)}', space=vmem, size = 0x9000, scoped, tag = 'internal scratch']
  %s0 = inlined_call_operand.hbm [shape: f32[8,128], index: 0, kind: input, shape index: {}]
  %s1 = inlined_call_operand.hbm [shape: f32[8,128], index: 1, kind: output, shape index: {}]
  %s2 = sld [smem:[#allocation0]]
  $region41: #{tpu_custom_call.1} parent=0
    _
  %s4 = ssub.s32 1, %s2
  %s5 = scalar_select 0, %s4, %s2
  $region1: #{tpu_custom_call.1} parent=0
    #allocation2 [shape = 'u8[4096]{0}', space=vmem, size = 0x1000, scoped, tag = 'input window, operand 0, single buffered']
    #allocation3 [shape = 's32[2]{0}', space=sflag, size = 0x8, scoped, tag = 'scoped memory for tpu_custom_call.1']
    #allocation4 [shape = 's32[2]{0}', space=sflag, size = 0x8, scoped, tag = 'scoped memory for tpu_custom_call.1']
    #allocation5 [shape = 'u8[4096]{0}', space=vmem, size = 0x1000, scoped, tag = 'output window, operand 0, single buffered']
    %6 = vsyncpa [#allocation3], 0
    %7 = vsyncpa [#allocation4], 0
    loop: start=0, step=1, limit=4
    $region2: #{tpu_custom_call.1} parent=1 // loop_pre_header
      _
    $region3: #{tpu_custom_call.1} parent=1 // loop_header
      %s9 = sphi 0, %s13
      %p10 = scmp.ge.s32.totalorder %s9, 4
      %s17 = sphi 0, %s17
      %s19 = sphi 0, %s17
      %s20 = sphi 0, %s19
      %s34 = sphi 0, %s20
      %s38 = sphi 0, %s38
      %s40 = sphi 0, %s38
      %s41 = sphi 0, %s40
      %s55 = sphi 0, %s41
    $region4: #{tpu_custom_call.1} parent=1 // loop_header_branch
      %12 = sbr.rel (%p10) target = $region8
    $region5: #{tpu_custom_call.1} parent=1 // loop_body
      %s14 = ssub.s32 %s9, 1
      %s15 = ssub.s32 %s9, 2
      %s16 = sadd.s32 %s9, 1
      %s18 = sadd.s32 %s17, 1
      %p21 = scmp.eq.s32.totalorder %s9, 1
      %p22 = scmp.ne.s32.totalorder %s17, %s19
      %p23 = scmp.eq.s32.totalorder %s9, 0
      %p24 = por %p22, %p23
      %p25 = scmp.ne.s32.totalorder %s17, %s19
      %p26 = scmp.eq.s32.totalorder %s14, 1
      %p27 = por %p25, %p26
      %p28 = scmp.ne.s32.totalorder %s19, %s20
      %p29 = scmp.eq.s32.totalorder %s14, 0
      %p30 = por %p28, %p29
      %p31 = scmp.ne.s32.totalorder %s19, %s20
      %p32 = scmp.eq.s32.totalorder %s15, 1
      %p33 = por %p31, %p32
      %p35 = scmp.ne.s32.totalorder %s20, %s34
      %p36 = scmp.eq.s32.totalorder %s15, 0
      %p37 = por %p35, %p36
      %s39 = sadd.s32 %s38, 1
      %p42 = scmp.eq.s32.totalorder %s9, 1
      %p43 = scmp.ne.s32.totalorder %s38, %s40
      %p44 = scmp.eq.s32.totalorder %s9, 0
      %p45 = por %p43, %p44
      %p46 = scmp.ne.s32.totalorder %s38, %s40
      %p47 = scmp.eq.s32.totalorder %s14, 1
      %p48 = por %p46, %p47
      %p49 = scmp.ne.s32.totalorder %s40, %s41
      %p50 = scmp.eq.s32.totalorder %s14, 0
      %p51 = por %p49, %p50
      %p52 = scmp.ne.s32.totalorder %s40, %s41
      %p53 = scmp.eq.s32.totalorder %s15, 1
      %p54 = por %p52, %p53
      %p56 = scmp.ne.s32.totalorder %s41, %s55
      %p57 = scmp.eq.s32.totalorder %s15, 0
      %p58 = por %p56, %p57
      %p59 = scmp.le.s32.totalorder 1, %s9
      %p60 = scmp.lt.s32.totalorder %s9, 3
      %p61 = pnand %p59, %p60
      %p62 = pneg %p61
      // Predicated region
      $region9: #{tpu_custom_call.1} parent=5 // pred_check
        _
      $region10: #{tpu_custom_call.1} parent=5 // pred_check_branch
        %64 = sbr.rel (%p61) target = $region12
      $region11: #{tpu_custom_call.1} parent=5 // pred_region
        %s65 = ssub.s32 %s9, 1
        // Predicated region
        $region13: #{tpu_custom_call.1} parent=11 // pred_check
          %p66 = pneg %p30
        $region14: #{tpu_custom_call.1} parent=11 // pred_check_branch
          %68 = sbr.rel (%p66) target = $region16
        $region15: #{tpu_custom_call.1} parent=11 // pred_region
          %70 = vsyncadd [#allocation3], 0
          %s72 = sshll.u32 %s0, 4
          %s73 = int_to_ptr.hbm [resolvable:$true] %s72
          %s74 = sshll.u32 [#allocation2], 4
          %s75 = int_to_ptr.vmem [resolvable:$true] %s74
          %77 = dma.hbm_to_vmem [thread:$0]  %s73, 128, %s75, [#allocation3]
        $region16: #{tpu_custom_call.1} parent=11 // pred_fallthru
          _
      $region12: #{tpu_custom_call.1} parent=5 // pred_fallthru
        _
      %p78 = scmp.lt.s32.totalorder %s9, 2
      // Predicated region
      $region17: #{tpu_custom_call.1} parent=5 // pred_check
        %p79 = pneg %p78
      $region18: #{tpu_custom_call.1} parent=5 // pred_check_branch
        %81 = sbr.rel (%p79) target = $region20
      $region19: #{tpu_custom_call.1} parent=5 // pred_region
        _
      $region20: #{tpu_custom_call.1} parent=5 // pred_fallthru
        _
      %p82 = scmp.le.s32.totalorder 1, %s9
      %p83 = scmp.lt.s32.totalorder %s9, 3
      %p84 = pnand %p82, %p83
      %p85 = pneg %p84
      // Predicated region
      $region21: #{tpu_custom_call.1} parent=5 // pred_check
        _
      $region22: #{tpu_custom_call.1} parent=5 // pred_check_branch
        %87 = sbr.rel (%p84) target = $region24
      $region23: #{tpu_custom_call.1} parent=5 // pred_region
        %s88 = ssub.s32 %s9, 1
        // Predicated region
        $region25: #{tpu_custom_call.1} parent=23 // pred_check
          %p89 = pneg %p30
        $region26: #{tpu_custom_call.1} parent=23 // pred_check_branch
          %91 = sbr.rel (%p89) target = $region28
        $region27: #{tpu_custom_call.1} parent=23 // pred_region
          %93 = dma.done [#allocation3], 128
        $region28: #{tpu_custom_call.1} parent=23 // pred_fallthru
          _
        %p94 = pneg %p30
        %p95 = pneg %p27
        %p96 = pneg %p51
        %p97 = pneg %p48
        %v98 = vld [vmem:[#allocation2] sm:$0xff]
        %v99 = vmul.f32 %v98, 2.0
        %100 = vst [vmem:[#allocation5] sm:$0xff] %v99
        // Predicated region
        $region29: #{tpu_custom_call.1} parent=23 // pred_check
          %p101 = pneg %p48
        $region30: #{tpu_custom_call.1} parent=23 // pred_check_branch
          %103 = sbr.rel (%p101) target = $region32
        $region31: #{tpu_custom_call.1} parent=23 // pred_region
          %105 = vsyncadd [#allocation4], 0
          %s107 = sshll.u32 [#allocation5], 4
          %s108 = int_to_ptr.vmem [resolvable:$true] %s107
          %s109 = sshll.u32 %s1, 4
          %s110 = int_to_ptr.hbm [resolvable:$true] %s109
          %112 = dma.vmem_to_hbm [thread:$0]  %s108, 128, %s110, [#allocation4]
        $region32: #{tpu_custom_call.1} parent=23 // pred_fallthru
          _
        // Predicated region
        $region33: #{tpu_custom_call.1} parent=23 // pred_check
          %p113 = pneg %p48
        $region34: #{tpu_custom_call.1} parent=23 // pred_check_branch
          %115 = sbr.rel (%p113) target = $region36
        $region35: #{tpu_custom_call.1} parent=23 // pred_region
          %117 = dma.done [#allocation4], 128
        $region36: #{tpu_custom_call.1} parent=23 // pred_fallthru
          _
      $region24: #{tpu_custom_call.1} parent=5 // pred_fallthru
        _
      %p118 = scmp.le.s32.totalorder 2, %s9
      // Predicated region
      $region37: #{tpu_custom_call.1} parent=5 // pred_check
        %p119 = pneg %p118
      $region38: #{tpu_custom_call.1} parent=5 // pred_check_branch
        %121 = sbr.rel (%p119) target = $region40
      $region39: #{tpu_custom_call.1} parent=5 // pred_region
        %s122 = ssub.s32 %s9, 2
      $region40: #{tpu_custom_call.1} parent=5 // pred_fallthru
        _
    $region6: #{tpu_custom_call.1} parent=1 // loop_footer
      %s13 = sadd.s32 1, %s9
    $region7: #{tpu_custom_call.1} parent=1 // loop_footer_branch
      %8 = sbr.rel target = $region3
    $region8: #{tpu_custom_call.1} parent=1 // loop_exit
      _
    %123 = vsyncpa [#allocation3], 1
    %s124 = scalar_lea.sflag [#allocation3], 1
    %125 = vsyncpa %s124, 1
    %126 = vsyncpa [#allocation4], 1
    %s127 = scalar_lea.sflag [#allocation4], 1
    %128 = vsyncpa %s127, 1

// kernel: distil_bert_lstm_forward.7
$region0: #{distil_bert_lstm_forward.7}
  #allocation0 [shape = 'u32[]', space=smem, size = 0x4, offset = 0x4, fixed_abs, tag = 'smem constant byte address 0x4 - core index']
  #allocation1 [shape = 'u32[72,128]{1,0:T(1,128)}', space=vmem, size = 0x9000, scoped, tag = 'internal scratch']
  %s0 = inlined_call_operand.vmem [shape: f32[18,32], index: 0, kind: input, shape index: {}]
  %s1 = inlined_call_operand.vmem [shape: f32[1,32], index: 1, kind: input, shape index: {}]
  %s2 = inlined_call_operand.vmem [shape: f32[1,32], index: 2, kind: input, shape index: {}]
  %s3 = inlined_call_operand.vmem [shape: f32[18,32], index: 3, kind: output, shape index: {}]
  %s4 = sld [smem:[#allocation0]]
  $region22: #{distil_bert_lstm_forward.7} parent=0
    _
  %s6 = ssub.s32 1, %s4
  %s7 = scalar_select 0, %s6, %s4
  // Predicated region
  $region2: #{distil_bert_lstm_forward.7} parent=0 // pred_check
    _
  $region3: #{distil_bert_lstm_forward.7} parent=0 // pred_check_branch
    %9 = sbr.rel (0) target = $region5
  $region4: #{distil_bert_lstm_forward.7} parent=0 // pred_region
    _
  $region5: #{distil_bert_lstm_forward.7} parent=0 // pred_fallthru
    _
  // Predicated region
  $region6: #{distil_bert_lstm_forward.7} parent=0 // pred_check
    _
  $region7: #{distil_bert_lstm_forward.7} parent=0 // pred_check_branch
    %11 = sbr.rel (0) target = $region9
  $region8: #{distil_bert_lstm_forward.7} parent=0 // pred_region
    _
  $region9: #{distil_bert_lstm_forward.7} parent=0 // pred_fallthru
    _
  // Predicated region
  $region10: #{distil_bert_lstm_forward.7} parent=0 // pred_check
    _
  $region11: #{distil_bert_lstm_forward.7} parent=0 // pred_check_branch
    %13 = sbr.rel (0) target = $region13
  $region12: #{distil_bert_lstm_forward.7} parent=0 // pred_region
    _
  $region13: #{distil_bert_lstm_forward.7} parent=0 // pred_fallthru
    _
  %v14 = vld [vmem:[%s0] sm:$0xff]
  %v15 = vld [vmem:[%s0 + $0x8] sm:$0xff]
  %v16 = vld [vmem:[%s0 + $0x10] sm:$0x3]
  %vm17 = vcmask 261120
  %v18 = vsel %vm17, %v14, 0.0
  %19 = vadd.xlane.f32.xlu0 %v18
  %v20 = vpop.xlane.xlu0 %19
  %v21 = vsel %vm17, %v15, 0.0
  %22 = vadd.xlane.f32.xlu0 %v21
  %v23 = vpop.xlane.xlu0 %22
  %vm24 = vcmask 254976
  %v25 = vsel %vm24, %v16, 0.0
  %26 = vadd.xlane.f32.xlu0 %v25
  %v27 = vpop.xlane.xlu0 %26
  %v28 = vrcp.pop 32.0
  %v29 = vmul.f32 32.0, %v28
  %v30 = vsub.f32 1.0, %v29
  %v31 = vmul.f32 %v28, %v30
  %v32 = vadd.f32 %v28, %v31
  %vm33 = vweird.f32 %v28
  %v34 = vsel %vm33, %v28, %v32
  %v35 = vmul.f32 %v20, %v34
  %v36 = vmul.f32 %v23, %v34
  %v37 = vmul.f32 %v27, %v34
  %v38 = vsub.f32 %v14, %v35
  %v39 = vsub.f32 %v15, %v36
  %v40 = vsub.f32 %v16, %v37
  %v41 = vmul.f32 %v38, %v38
  %v42 = vmul.f32 %v39, %v39
  %v43 = vmul.f32 %v40, %v40
  %v44 = vsel %vm17, %v41, 0.0
  %45 = vadd.xlane.f32.xlu0 %v44
  %v46 = vpop.xlane.xlu0 %45
  %v47 = vsel %vm17, %v42, 0.0
  %48 = vadd.xlane.f32.xlu0 %v47
  %v49 = vpop.xlane.xlu0 %48
  %v50 = vsel %vm24, %v43, 0.0
  %51 = vadd.xlane.f32.xlu0 %v50
  %v52 = vpop.xlane.xlu0 %51
  %v53 = vmul.f32 %v46, %v34
  %v54 = vmul.f32 %v49, %v34
  %v55 = vmul.f32 %v52, %v34
  %v56 = vadd.f32 %v53, 1e-12
  %v57 = vadd.f32 %v54, 1e-12
  %v58 = vadd.f32 %v55, 1e-12
  %v59 = vrsqrt.pop %v56
  %v60 = vmul.f32 %v59, %v56
  %v61 = vmul.f32 %v60, %v59
  %v62 = vmul.f32 0.5, %v61
  %v63 = vsub.f32 1.5, %v62
  %v64 = vmul.f32 %v59, %v63
  %vm65 = vweird.f32 %v56
  %vm66 = vweird.f32 %v59
  %vm67 = vmor %vm65, %vm66
  %v68 = vsel %vm67, %v59, %v64
  %v69 = vrsqrt.pop %v57
  %v70 = vmul.f32 %v69, %v57
  %v71 = vmul.f32 %v70, %v69
  %v72 = vmul.f32 0.5, %v71
  %v73 = vsub.f32 1.5, %v72
  %v74 = vmul.f32 %v69, %v73
  %vm75 = vweird.f32 %v57
  %vm76 = vweird.f32 %v69
  %vm77 = vmor %vm75, %vm76
  %v78 = vsel %vm77, %v69, %v74
  %v79 = vrsqrt.pop %v58
  %v80 = vmul.f32 %v79, %v58
  %v81 = vmul.f32 %v80, %v79
  %v82 = vmul.f32 0.5, %v81
  %v83 = vsub.f32 1.5, %v82
  %v84 = vmul.f32 %v79, %v83
  %vm85 = vweird.f32 %v58
  %vm86 = vweird.f32 %v79
  %vm87 = vmor %vm85, %vm86
  %v88 = vsel %vm87, %v79, %v84
  %v89 = vmul.f32 %v38, %v68
  %v90 = vmul.f32 %v39, %v78
  %v91 = vmul.f32 %v40, %v88
  %v92 = vld [vmem:[%s1] sm:$0x1]
  %v94 = vperm.slane %v92, 0
  %v96 = vmul.f32 %v89, %v94
  %v97 = vmul.f32 %v90, %v94
  %v98 = vmul.f32 %v91, %v94
  %v99 = vld [vmem:[%s2] sm:$0x1]
  %v101 = vperm.slane %v99, 0
  %v103 = vadd.f32 %v96, %v101
  %v104 = vadd.f32 %v97, %v101
  %v105 = vadd.f32 %v98, %v101
  %106 = vst.msk [vmem:[%s3] sm:$0xff] %vm17, %v103
  %107 = vst.msk [vmem:[%s3 + $0x8] sm:$0xff] %vm17, %v104
  %108 = vst.msk [vmem:[%s3 + $0x10] sm:$0x3] %vm24, %v105
  // Predicated region
  $region14: #{distil_bert_lstm_forward.7} parent=0 // pred_check
    _
  $region15: #{distil_bert_lstm_forward.7} parent=0 // pred_check_branch
    %110 = sbr.rel (0) target = $region17
  $region16: #{distil_bert_lstm_forward.7} parent=0 // pred_region
    _
  $region17: #{distil_bert_lstm_forward.7} parent=0 // pred_fallthru
    _
  // Predicated region
  $region18: #{distil_bert_lstm_forward.7} parent=0 // pred_check
    _
  $region19: #{distil_bert_lstm_forward.7} parent=0 // pred_check_branch
    %112 = sbr.rel (0) target = $region21
  $region20: #{distil_bert_lstm_forward.7} parent=0 // pred_region
    _
  $region21: #{distil_bert_lstm_forward.7} parent=0 // pred_fallthru
    _

// kernel: distil_bert_lstm_forward.8
$region0: #{distil_bert_lstm_forward.8}
  #allocation0 [shape = 'u32[]', space=smem, size = 0x4, offset = 0x4, fixed_abs, tag = 'smem constant byte address 0x4 - core index']
  #allocation1 [shape = 'u32[72,128]{1,0:T(1,128)}', space=vmem, size = 0x9000, scoped, tag = 'internal scratch']
  %s0 = inlined_call_operand.vmem [shape: f32[2,9,32], index: 0, kind: input, shape index: {}]
  %s1 = inlined_call_operand.vmem [shape: f32[2,1,9], index: 1, kind: input, shape index: {}]
  %s2 = inlined_call_operand.vmem [shape: bf16[32,96], index: 2, kind: input, shape index: {}]
  %s3 = inlined_call_operand.vmem [shape: f32[1,96], index: 3, kind: input, shape index: {}]
  %s4 = inlined_call_operand.vmem [shape: bf16[32,32], index: 4, kind: input, shape index: {}]
  %s5 = inlined_call_operand.vmem [shape: f32[1,32], index: 5, kind: input, shape index: {}]
  %s6 = inlined_call_operand.vmem [shape: f32[1,32], index: 6, kind: input, shape index: {}]
  %s7 = inlined_call_operand.vmem [shape: f32[1,32], index: 7, kind: input, shape index: {}]
  %s8 = inlined_call_operand.vmem [shape: f32[2,9,32], index: 8, kind: output, shape index: {}]
  %s9 = sld [smem:[#allocation0]]
  $region65: #{distil_bert_lstm_forward.8} parent=0
    _
  %s11 = ssub.s32 1, %s9
  %s12 = scalar_select 0, %s11, %s9
  loop: start=0, step=1, limit=4
  $region2: #{distil_bert_lstm_forward.8} parent=0 // loop_pre_header
    _
  $region3: #{distil_bert_lstm_forward.8} parent=0 // loop_header
    %s14 = sphi 0, %s18
    %p15 = scmp.ge.s32.totalorder %s14, 4
    %s24 = sphi 0, %s26
    %s27 = sphi 0, %s24
    %s28 = sphi 0, %s27
    %s44 = sphi 0, %s28
    %s50 = sphi 0, %s52
    %s53 = sphi 0, %s50
    %s54 = sphi 0, %s53
    %s70 = sphi 0, %s54
    %s74 = sphi 0, %s74
    %s76 = sphi 0, %s74
    %s77 = sphi 0, %s76
    %s91 = sphi 0, %s77
    %s95 = sphi 0, %s95
    %s97 = sphi 0, %s95
    %s98 = sphi 0, %s97
    %s112 = sphi 0, %s98
    %s116 = sphi 0, %s116
    %s118 = sphi 0, %s116
    %s119 = sphi 0, %s118
    %s133 = sphi 0, %s119
    %s137 = sphi 0, %s137
    %s139 = sphi 0, %s137
    %s140 = sphi 0, %s139
    %s154 = sphi 0, %s140
    %s158 = sphi 0, %s158
    %s160 = sphi 0, %s158
    %s161 = sphi 0, %s160
    %s175 = sphi 0, %s161
    %s179 = sphi 0, %s179
    %s181 = sphi 0, %s179
    %s182 = sphi 0, %s181
    %s196 = sphi 0, %s182
    %s202 = sphi 0, %s204
    %s205 = sphi 0, %s202
    %s206 = sphi 0, %s205
    %s222 = sphi 0, %s206
  $region4: #{distil_bert_lstm_forward.8} parent=0 // loop_header_branch
    %17 = sbr.rel (%p15) target = $region8
  $region5: #{distil_bert_lstm_forward.8} parent=0 // loop_body
    %s19 = ssub.s32 %s14, 1
    %s20 = ssub.s32 %s14, 2
    %s21 = sadd.s32 %s14, 1
    %s22 = ssub.s32 %s14, %s21
    %p23 = scmp.eq.s32.totalorder %s22, 0
    %s25 = sadd.s32 %s24, 1
    %s26 = scalar_select %p23, %s24, %s25
    %p29 = pneg %p23
    %p30 = scmp.eq.s32.totalorder %s14, 1
    %p31 = por %p29, %p30
    %p32 = scmp.ne.s32.totalorder %s24, %s27
    %p33 = scmp.eq.s32.totalorder %s14, 0
    %p34 = por %p32, %p33
    %p35 = scmp.ne.s32.totalorder %s24, %s27
    %p36 = scmp.eq.s32.totalorder %s19, 1
    %p37 = por %p35, %p36
    %p38 = scmp.ne.s32.totalorder %s27, %s28
    %p39 = scmp.eq.s32.totalorder %s19, 0
    %p40 = por %p38, %p39
    %p41 = scmp.ne.s32.totalorder %s27, %s28
    %p42 = scmp.eq.s32.totalorder %s20, 1
    %p43 = por %p41, %p42
    %p45 = scmp.ne.s32.totalorder %s28, %s44
    %p46 = scmp.eq.s32.totalorder %s20, 0
    %p47 = por %p45, %p46
    %s48 = ssub.s32 %s14, %s21
    %p49 = scmp.eq.s32.totalorder %s48, 0
    %s51 = sadd.s32 %s50, 1
    %s52 = scalar_select %p49, %s50, %s51
    %p55 = pneg %p49
    %p56 = scmp.eq.s32.totalorder %s14, 1
    %p57 = por %p55, %p56
    %p58 = scmp.ne.s32.totalorder %s50, %s53
    %p59 = scmp.eq.s32.totalorder %s14, 0
    %p60 = por %p58, %p59
    %p61 = scmp.ne.s32.totalorder %s50, %s53
    %p62 = scmp.eq.s32.totalorder %s19, 1
    %p63 = por %p61, %p62
    %p64 = scmp.ne.s32.totalorder %s53, %s54
    %p65 = scmp.eq.s32.totalorder %s19, 0
    %p66 = por %p64, %p65
    %p67 = scmp.ne.s32.totalorder %s53, %s54
    %p68 = scmp.eq.s32.totalorder %s20, 1
    %p69 = por %p67, %p68
    %p71 = scmp.ne.s32.totalorder %s54, %s70
    %p72 = scmp.eq.s32.totalorder %s20, 0
    %p73 = por %p71, %p72
    %s75 = sadd.s32 %s74, 1
    %p78 = scmp.eq.s32.totalorder %s14, 1
    %p79 = scmp.ne.s32.totalorder %s74, %s76
    %p80 = scmp.eq.s32.totalorder %s14, 0
    %p81 = por %p79, %p80
    %p82 = scmp.ne.s32.totalorder %s74, %s76
    %p83 = scmp.eq.s32.totalorder %s19, 1
    %p84 = por %p82, %p83
    %p85 = scmp.ne.s32.totalorder %s76, %s77
    %p86 = scmp.eq.s32.totalorder %s19, 0
    %p87 = por %p85, %p86
    %p88 = scmp.ne.s32.totalorder %s76, %s77
    %p89 = scmp.eq.s32.totalorder %s20, 1
    %p90 = por %p88, %p89
    %p92 = scmp.ne.s32.totalorder %s77, %s91
    %p93 = scmp.eq.s32.totalorder %s20, 0
    %p94 = por %p92, %p93
    %s96 = sadd.s32 %s95, 1
    %p99 = scmp.eq.s32.totalorder %s14, 1
    %p100 = scmp.ne.s32.totalorder %s95, %s97
    %p101 = scmp.eq.s32.totalorder %s14, 0
    %p102 = por %p100, %p101
    %p103 = scmp.ne.s32.totalorder %s95, %s97
    %p104 = scmp.eq.s32.totalorder %s19, 1
    %p105 = por %p103, %p104
    %p106 = scmp.ne.s32.totalorder %s97, %s98
    %p107 = scmp.eq.s32.totalorder %s19, 0
    %p108 = por %p106, %p107
    %p109 = scmp.ne.s32.totalorder %s97, %s98
    %p110 = scmp.eq.s32.totalorder %s20, 1
    %p111 = por %p109, %p110
    %p113 = scmp.ne.s32.totalorder %s98, %s112
    %p114 = scmp.eq.s32.totalorder %s20, 0
    %p115 = por %p113, %p114
    %s117 = sadd.s32 %s116, 1
    %p120 = scmp.eq.s32.totalorder %s14, 1
    %p121 = scmp.ne.s32.totalorder %s116, %s118
    %p122 = scmp.eq.s32.totalorder %s14, 0
    %p123 = por %p121, %p122
    %p124 = scmp.ne.s32.totalorder %s116, %s118
    %p125 = scmp.eq.s32.totalorder %s19, 1
    %p126 = por %p124, %p125
    %p127 = scmp.ne.s32.totalorder %s118, %s119
    %p128 = scmp.eq.s32.totalorder %s19, 0
    %p129 = por %p127, %p128
    %p130 = scmp.ne.s32.totalorder %s118, %s119
    %p131 = scmp.eq.s32.totalorder %s20, 1
    %p132 = por %p130, %p131
    %p134 = scmp.ne.s32.totalorder %s119, %s133
    %p135 = scmp.eq.s32.totalorder %s20, 0
    %p136 = por %p134, %p135
    %s138 = sadd.s32 %s137, 1
    %p141 = scmp.eq.s32.totalorder %s14, 1
    %p142 = scmp.ne.s32.totalorder %s137, %s139
    %p143 = scmp.eq.s32.totalorder %s14, 0
    %p144 = por %p142, %p143
    %p145 = scmp.ne.s32.totalorder %s137, %s139
    %p146 = scmp.eq.s32.totalorder %s19, 1
    %p147 = por %p145, %p146
    %p148 = scmp.ne.s32.totalorder %s139, %s140
    %p149 = scmp.eq.s32.totalorder %s19, 0
    %p150 = por %p148, %p149
    %p151 = scmp.ne.s32.totalorder %s139, %s140
    %p152 = scmp.eq.s32.totalorder %s20, 1
    %p153 = por %p151, %p152
    %p155 = scmp.ne.s32.totalorder %s140, %s154
    %p156 = scmp.eq.s32.totalorder %s20, 0
    %p157 = por %p155, %p156
    %s159 = sadd.s32 %s158, 1
    %p162 = scmp.eq.s32.totalorder %s14, 1
    %p163 = scmp.ne.s32.totalorder %s158, %s160
    %p164 = scmp.eq.s32.totalorder %s14, 0
    %p165 = por %p163, %p164
    %p166 = scmp.ne.s32.totalorder %s158, %s160
    %p167 = scmp.eq.s32.totalorder %s19, 1
    %p168 = por %p166, %p167
    %p169 = scmp.ne.s32.totalorder %s160, %s161
    %p170 = scmp.eq.s32.totalorder %s19, 0
    %p171 = por %p169, %p170
    %p172 = scmp.ne.s32.totalorder %s160, %s161
    %p173 = scmp.eq.s32.totalorder %s20, 1
    %p174 = por %p172, %p173
    %p176 = scmp.ne.s32.totalorder %s161, %s175
    %p177 = scmp.eq.s32.totalorder %s20, 0
    %p178 = por %p176, %p177
    %s180 = sadd.s32 %s179, 1
    %p183 = scmp.eq.s32.totalorder %s14, 1
    %p184 = scmp.ne.s32.totalorder %s179, %s181
    %p185 = scmp.eq.s32.totalorder %s14, 0
    %p186 = por %p184, %p185
    %p187 = scmp.ne.s32.totalorder %s179, %s181
    %p188 = scmp.eq.s32.totalorder %s19, 1
    %p189 = por %p187, %p188
    %p190 = scmp.ne.s32.totalorder %s181, %s182
    %p191 = scmp.eq.s32.totalorder %s19, 0
    %p192 = por %p190, %p191
    %p193 = scmp.ne.s32.totalorder %s181, %s182
    %p194 = scmp.eq.s32.totalorder %s20, 1
    %p195 = por %p193, %p194
    %p197 = scmp.ne.s32.totalorder %s182, %s196
    %p198 = scmp.eq.s32.totalorder %s20, 0
    %p199 = por %p197, %p198
    %s200 = ssub.s32 %s14, %s21
    %p201 = scmp.eq.s32.totalorder %s200, 0
    %s203 = sadd.s32 %s202, 1
    %s204 = scalar_select %p201, %s202, %s203
    %p207 = pneg %p201
    %p208 = scmp.eq.s32.totalorder %s14, 1
    %p209 = por %p207, %p208
    %p210 = scmp.ne.s32.totalorder %s202, %s205
    %p211 = scmp.eq.s32.totalorder %s14, 0
    %p212 = por %p210, %p211
    %p213 = scmp.ne.s32.totalorder %s202, %s205
    %p214 = scmp.eq.s32.totalorder %s19, 1
    %p215 = por %p213, %p214
    %p216 = scmp.ne.s32.totalorder %s205, %s206
    %p217 = scmp.eq.s32.totalorder %s19, 0
    %p218 = por %p216, %p217
    %p219 = scmp.ne.s32.totalorder %s205, %s206
    %p220 = scmp.eq.s32.totalorder %s20, 1
    %p221 = por %p219, %p220
    %p223 = scmp.ne.s32.totalorder %s206, %s222
    %p224 = scmp.eq.s32.totalorder %s20, 0
    %p225 = por %p223, %p224
    %p226 = scmp.le.s32.totalorder 1, %s14
    %p227 = scmp.lt.s32.totalorder %s14, 3
    %p228 = pnand %p226, %p227
    %p229 = pneg %p228
    // Predicated region
    $region9: #{distil_bert_lstm_forward.8} parent=5 // pred_check
      _
    $region10: #{distil_bert_lstm_forward.8} parent=5 // pred_check_branch
      %231 = sbr.rel (%p228) target = $region12
    $region11: #{distil_bert_lstm_forward.8} parent=5 // pred_region
      %s232 = ssub.s32 %s14, 1
      // Predicated region
      $region13: #{distil_bert_lstm_forward.8} parent=11 // pred_check
        %p233 = pneg %p87
      $region14: #{distil_bert_lstm_forward.8} parent=11 // pred_check_branch
        %235 = sbr.rel (%p233) target = $region16
      $region15: #{distil_bert_lstm_forward.8} parent=11 // pred_region
        _
      $region16: #{distil_bert_lstm_forward.8} parent=11 // pred_fallthru
        _
      // Predicated region
      $region17: #{distil_bert_lstm_forward.8} parent=11 // pred_check
        %p236 = pneg %p108
      $region18: #{distil_bert_lstm_forward.8} parent=11 // pred_check_branch
        %238 = sbr.rel (%p236) target = $region20
      $region19: #{distil_bert_lstm_forward.8} parent=11 // pred_region
        _
      $region20: #{distil_bert_lstm_forward.8} parent=11 // pred_fallthru
        _
      // Predicated region
      $region21: #{distil_bert_lstm_forward.8} parent=11 // pred_check
        %p239 = pneg %p129
      $region22: #{distil_bert_lstm_forward.8} parent=11 // pred_check_branch
        %241 = sbr.rel (%p239) target = $region24
      $region23: #{distil_bert_lstm_forward.8} parent=11 // pred_region
        _
      $region24: #{distil_bert_lstm_forward.8} parent=11 // pred_fallthru
        _
      // Predicated region
      $region25: #{distil_bert_lstm_forward.8} parent=11 // pred_check
        %p242 = pneg %p150
      $region26: #{distil_bert_lstm_forward.8} parent=11 // pred_check_branch
        %244 = sbr.rel (%p242) target = $region28
      $region27: #{distil_bert_lstm_forward.8} parent=11 // pred_region
        _
      $region28: #{distil_bert_lstm_forward.8} parent=11 // pred_fallthru
        _
      // Predicated region
      $region29: #{distil_bert_lstm_forward.8} parent=11 // pred_check
        %p245 = pneg %p171
      $region30: #{distil_bert_lstm_forward.8} parent=11 // pred_check_branch
        %247 = sbr.rel (%p245) target = $region32
      $region31: #{distil_bert_lstm_forward.8} parent=11 // pred_region
        _
      $region32: #{distil_bert_lstm_forward.8} parent=11 // pred_fallthru
        _
      // Predicated region
      $region33: #{distil_bert_lstm_forward.8} parent=11 // pred_check
        %p248 = pneg %p192
      $region34: #{distil_bert_lstm_forward.8} parent=11 // pred_check_branch
        %250 = sbr.rel (%p248) target = $region36
      $region35: #{distil_bert_lstm_forward.8} parent=11 // pred_region
        _
      $region36: #{distil_bert_lstm_forward.8} parent=11 // pred_fallthru
        _
    $region12: #{distil_bert_lstm_forward.8} parent=5 // pred_fallthru
      _
    %p251 = scmp.lt.s32.totalorder %s14, 2
    // Predicated region
    $region37: #{distil_bert_lstm_forward.8} parent=5 // pred_check
      %p252 = pneg %p251
    $region38: #{distil_bert_lstm_forward.8} parent=5 // pred_check_branch
      %254 = sbr.rel (%p252) target = $region40
    $region39: #{distil_bert_lstm_forward.8} parent=5 // pred_region
      // Predicated region
      $region41: #{distil_bert_lstm_forward.8} parent=39 // pred_check
        %p255 = pneg %p34
      $region42: #{distil_bert_lstm_forward.8} parent=39 // pred_check_branch
        %257 = sbr.rel (%p255) target = $region44
      $region43: #{distil_bert_lstm_forward.8} parent=39 // pred_region
        %p258 = scmp.lt.s32.totalorder %s14, 1
        %s259 = scalar_select %p258, %s14, 1
        %s260 = smul.addr %s259, 2
        %s261 = smul.addr %s260, 8
        %s262 = scalar_lea.vmem %s0, %s261
      $region44: #{distil_bert_lstm_forward.8} parent=39 // pred_fallthru
        _
      // Predicated region
      $region45: #{distil_bert_lstm_forward.8} parent=39 // pred_check
        %p263 = pneg %p60
      $region46: #{distil_bert_lstm_forward.8} parent=39 // pred_check_branch
        %265 = sbr.rel (%p263) target = $region48
      $region47: #{distil_bert_lstm_forward.8} parent=39 // pred_region
        %p266 = scmp.lt.s32.totalorder %s14, 1
        %s267 = scalar_select %p266, %s14, 1
        %s268 = scalar_lea.vmem %s1, %s267
      $region48: #{distil_bert_lstm_forward.8} parent=39 // pred_fallthru
        _
    $region40: #{distil_bert_lstm_forward.8} parent=5 // pred_fallthru
      _
    %p269 = scmp.le.s32.totalorder 1, %s14
    %p270 = scmp.lt.s32.totalorder %s14, 3
    %p271 = pnand %p269, %p270
    %p272 = pneg %p271
    // Predicated region
    $region49: #{distil_bert_lstm_forward.8} parent=5 // pred_check
      _
    $region50: #{distil_bert_lstm_forward.8} parent=5 // pred_check_branch
      %274 = sbr.rel (%p271) target = $region52
    $region51: #{distil_bert_lstm_forward.8} parent=5 // pred_region
      %s275 = ssub.s32 %s14, 1
      %p276 = scmp.lt.s32.totalorder %s19, 1
      %s277 = scalar_select %p276, %s19, 1
      %s278 = smul.addr %s277, 2
      %s279 = smul.addr %s278, 8
      %s280 = scalar_lea.vmem %s0, %s279
      %p281 = pneg %p40
      %p282 = pneg %p37
      %p283 = scmp.lt.s32.totalorder %s19, 1
      %s284 = scalar_select %p283, %s19, 1
      %s285 = scalar_lea.vmem %s1, %s284
      %p286 = pneg %p66
      %p287 = pneg %p63
      %p288 = pneg %p87
      %p289 = pneg %p84
      %p290 = pneg %p108
      %p291 = pneg %p105
      %p292 = pneg %p129
      %p293 = pneg %p126
      %p294 = pneg %p150
      %p295 = pneg %p147
      %p296 = pneg %p171
      %p297 = pneg %p168
      %p298 = pneg %p192
      %p299 = pneg %p189
      %p300 = pneg %p218
      %p301 = pneg %p215
      %p302 = scmp.lt.s32.totalorder %s19, 1
      %s303 = scalar_select %p302, %s19, 1
      %s304 = smul.addr %s303, 2
      %s305 = smul.addr %s304, 8
      %s306 = scalar_lea.vmem %s8, %s305
      %p307 = scmp.lt.s32.totalorder %s19, 1
      %s308 = scalar_select %p307, %s19, 1
      %s309 = smul.addr %s308, 2
      %s310 = smul.addr %s309, 8
      %s311 = scalar_lea.vmem %s0, %s310
      %p312 = scmp.lt.s32.totalorder %s19, 1
      %s313 = scalar_select %p312, %s19, 1
      %s314 = scalar_lea.vmem %s1, %s313
      %p315 = scmp.lt.s32.totalorder %s19, 1
      %s316 = scalar_select %p315, %s19, 1
      %s317 = smul.addr %s316, 2
      %s318 = smul.addr %s317, 8
      %s319 = scalar_lea.vmem %s8, %s318
      %v321 = vld [vmem:[%s311] sm:$0xff]
      %v322 = vld [vmem:[%s311 + $0x8] sm:$0x1]
      %v323 = vld [vmem:[%s314] sm:$0x1]
      %v324 = vld [vmem:[%s2] sm:$0xf]
      %v325 = vld [vmem:[%s2 + $0x4] sm:$0xf]
      %v326 = vld [vmem:[%s2 + $0x8] sm:$0xf]
      %v327 = vld [vmem:[%s2 + $0xc] sm:$0xf]
      %v328 = vpack.c.bf16 %v322, %v321
      %v329 = vld [vmem:[%s3] sm:$0x1]
      %v331 = vperm.slane %v329, 0
      %v337 = vunpack.c.l.b16 %v324
      %v338 = vunpack.c.l.b16 %v325
      %v339 = vunpack.c.l.b16 %v326
      %v340 = vunpack.c.l.b16 %v327
      %v341 = vpack.c.b16 %v338, %v337
      %v342 = vpack.c.b16 %v340, %v339
      %vm345 = vcmask 261120
      %v347 = vsel %vm345, %v328, 0
      %349 = vmatpush.bf16.msra.mxu0 0
      %350 = vmatpush.bf16.msra.mxu0 0
      %351 = vmatpush.bf16.msra.mxu0 0
      %352 = vmatpush.bf16.msra.mxu0 0
      %353 = vmatpush.bf16.msra.mxu0 0
      %354 = vmatpush.bf16.msra.mxu0 0
      %355 = vmatpush.bf16.msra.mxu0 %v342
      %356 = vmatpush.bf16.msra.mxu0 %v341
      %357 = vmatmul.bf16.gmra.mxu0 %v347
      %v358 = vpop.f32.mrf.mxu0
      %v359 = vadd.f32 %v331, %v358
      %v360 = vpop.f32.mrf.mxu0
      %v361 = vadd.f32 %v331, %v360
      %362 = vdwg.mxu0
      %v363 = vpack.c.bf16 %v359, %v359
      %v364 = vpack.c.bf16 %v361, %v361
      %v366 = vperm.slane %v323, 0
      %v370 = vunpack.c.l.b16 %v363
      %v371 = vunpack.c.l.b16 %v364
      %v372 = vpack.c.b16 %v371, %v370
      %373 = vrot.lane.b32.xlu0 %v372, 96
      %v374 = vpop.permute.xlu0 %373
      %vm375 = vcmask 64512
      %v377 = vsel %vm375, %v372, 0
      %v380 = vsel %vm375, %v374, 0
      %382 = vmatpush.bf16.xpose.msra.mxu0 0
      %383 = vmatpush.bf16.xpose.msra.mxu0 0
      %384 = vmatpush.bf16.xpose.msra.mxu0 0
      %385 = vmatpush.bf16.xpose.msra.mxu0 0
      %386 = vmatpush.bf16.xpose.msra.mxu0 0
      %387 = vmatpush.bf16.xpose.msra.mxu0 0
      %388 = vmatpush.bf16.xpose.msra.mxu0 0
      %389 = vmatpush.bf16.xpose.msra.mxu0 %v380
      %390 = vmatmul.bf16.gmra.mxu0 %v377
      %v391 = vpop.f32.mrf.mxu0
      %v392 = vadd.f32 %v366, %v391
      %v393 = vpop.f32.mrf.mxu0
      %v394 = vadd.f32 %v366, %v393
      %395 = vdwg.mxu0
      %vm396 = vcmask 72704
      %v397 = vsel %vm396, %v392, -inf
      %398 = vmax.xlane.f32.xlu0 %v397
      %v399 = vpop.xlane.xlu0 %398
      %vm400 = vcmask 65536
      %v401 = vsel %vm400, %v394, -inf
      %402 = vmax.xlane.f32.xlu0 %v401
      %v403 = vpop.xlane.xlu0 %402
      %v404 = vsub.f32 %v392, %v399
      %v405 = vsub.f32 %v394, %v403
      %v406 = vmul.f32 %v404, 1.442695
      %v407 = vpow.pop %v406
      %v408 = vmul.f32 %v405, 1.442695
      %v409 = vpow.pop %v408
      %v410 = vsel %vm396, %v407, 0.0
      %411 = vadd.xlane.f32.xlu0 %v410
      %v412 = vpop.xlane.xlu0 %411
      %v413 = vsel %vm400, %v409, 0.0
      %414 = vadd.xlane.f32.xlu0 %v413
      %v415 = vpop.xlane.xlu0 %414
      %v416 = vrcp.pop %v412
      %v417 = vrcp.pop %v415
      %v418 = vmul.f32 %v407, %v416
      %v419 = vmul.f32 %v409, %v417
      %v420 = vpack.c.bf16 %v419, %v418
      %421 = vrot.lane.b32.xlu0 %v372, 64
      %v422 = vpop.permute.xlu0 %421
      %v424 = vsel %vm396, %v420, 0
      %vm426 = vcmask 1043456
      %vm427 = vcmask 1044480
      %v428 = vsel %vm426, 4294967295, 65535
      %v429 = vsel %vm427, %v428, 0
      %v431 = vand.u32 %v422, %v429
      %433 = vmatpush.bf16.msra.mxu0 0
      %434 = vmatpush.bf16.msra.mxu0 0
      %435 = vmatpush.bf16.msra.mxu0 0
      %436 = vmatpush.bf16.msra.mxu0 0
      %437 = vmatpush.bf16.msra.mxu0 0
      %438 = vmatpush.bf16.msra.mxu0 0
      %439 = vmatpush.bf16.msra.mxu0 0
      %440 = vmatpush.bf16.msra.mxu0 %v431
      %441 = vmatmul.bf16.gmra.mxu0 %v424
      %v442 = vpop.f32.mrf.mxu0
      %v443 = vadd.f32 0.0, %v442
      %v444 = vpop.f32.mrf.mxu0
      %v445 = vadd.f32 0.0, %v444
      %446 = vdwg.mxu0
      %447 = vrot.lane.b32.xlu0 %v372, 120
      %v448 = vpop.permute.xlu0 %447
      %449 = vrot.lane.b32.xlu0 %v372, 88
      %v450 = vpop.permute.xlu0 %449
      %v452 = vsel %vm375, %v448, 0
      %v455 = vsel %vm375, %v450, 0
      %457 = vmatpush.bf16.xpose.msra.mxu0 0
      %458 = vmatpush.bf16.xpose.msra.mxu0 0
      %459 = vmatpush.bf16.xpose.msra.mxu0 0
      %460 = vmatpush.bf16.xpose.msra.mxu0 0
      %461 = vmatpush.bf16.xpose.msra.mxu0 0
      %462 = vmatpush.bf16.xpose.msra.mxu0 0
      %463 = vmatpush.bf16.xpose.msra.mxu0 0
      %464 = vmatpush.bf16.xpose.msra.mxu0 %v455
      %465 = vmatmul.bf16.gmra.mxu0 %v452
      %v466 = vpop.f32.mrf.mxu0
      %v467 = vadd.f32 %v366, %v466
      %v468 = vpop.f32.mrf.mxu0
      %v469 = vadd.f32 %v366, %v468
      %470 = vdwg.mxu0
      %v471 = vsel %vm396, %v467, -inf
      %472 = vmax.xlane.f32.xlu0 %v471
      %v473 = vpop.xlane.xlu0 %472
      %v474 = vsel %vm400, %v469, -inf
      %475 = vmax.xlane.f32.xlu0 %v474
      %v476 = vpop.xlane.xlu0 %475
      %v477 = vsub.f32 %v467, %v473
      %v478 = vsub.f32 %v469, %v476
      %v479 = vmul.f32 %v477, 1.442695
      %v480 = vpow.pop %v479
      %v481 = vmul.f32 %v478, 1.442695
      %v482 = vpow.pop %v481
      %v483 = vsel %vm396, %v480, 0.0
      %484 = vadd.xlane.f32.xlu0 %v483
      %v485 = vpop.xlane.xlu0 %484
      %v486 = vsel %vm400, %v482, 0.0
      %487 = vadd.xlane.f32.xlu0 %v486
      %v488 = vpop.xlane.xlu0 %487
      %v489 = vrcp.pop %v485
      %v490 = vrcp.pop %v488
      %v491 = vmul.f32 %v480, %v489
      %v492 = vmul.f32 %v482, %v490
      %v493 = vpack.c.bf16 %v492, %v491
      %494 = vrot.lane.b32.xlu0 %v372, 56
      %v495 = vpop.permute.xlu0 %494
      %v497 = vsel %vm396, %v493, 0
      %v500 = vand.u32 %v495, %v429
      %502 = vmatpush.bf16.msra.mxu0 0
      %503 = vmatpush.bf16.msra.mxu0 0
      %504 = vmatpush.bf16.msra.mxu0 0
      %505 = vmatpush.bf16.msra.mxu0 0
      %506 = vmatpush.bf16.msra.mxu0 0
      %507 = vmatpush.bf16.msra.mxu0 0
      %508 = vmatpush.bf16.msra.mxu0 0
      %509 = vmatpush.bf16.msra.mxu0 %v500
      %510 = vmatmul.bf16.gmra.mxu0 %v497
      %v511 = vpop.f32.mrf.mxu0
      %v512 = vadd.f32 0.0, %v511
      %v513 = vpop.f32.mrf.mxu0
      %v514 = vadd.f32 0.0, %v513
      %515 = vdwg.mxu0
      %516 = vrot.lane.b32.xlu0 %v372, 112
      %v517 = vpop.permute.xlu0 %516
      %518 = vrot.lane.b32.xlu0 %v372, 80
      %v519 = vpop.permute.xlu0 %518
      %v521 = vsel %vm375, %v517, 0
      %v524 = vsel %vm375, %v519, 0
      %526 = vmatpush.bf16.xpose.msra.mxu0 0
      %527 = vmatpush.bf16.xpose.msra.mxu0 0
      %528 = vmatpush.bf16.xpose.msra.mxu0 0
      %529 = vmatpush.bf16.xpose.msra.mxu0 0
      %530 = vmatpush.bf16.xpose.msra.mxu0 0
      %531 = vmatpush.bf16.xpose.msra.mxu0 0
      %532 = vmatpush.bf16.xpose.msra.mxu0 0
      %533 = vmatpush.bf16.xpose.msra.mxu0 %v524
      %534 = vmatmul.bf16.gmra.mxu0 %v521
      %v535 = vpop.f32.mrf.mxu0
      %v536 = vadd.f32 %v366, %v535
      %v537 = vpop.f32.mrf.mxu0
      %v538 = vadd.f32 %v366, %v537
      %539 = vdwg.mxu0
      %v540 = vsel %vm396, %v536, -inf
      %541 = vmax.xlane.f32.xlu0 %v540
      %v542 = vpop.xlane.xlu0 %541
      %v543 = vsel %vm400, %v538, -inf
      %544 = vmax.xlane.f32.xlu0 %v543
      %v545 = vpop.xlane.xlu0 %544
      %v546 = vsub.f32 %v536, %v542
      %v547 = vsub.f32 %v538, %v545
      %v548 = vmul.f32 %v546, 1.442695
      %v549 = vpow.pop %v548
      %v550 = vmul.f32 %v547, 1.442695
      %v551 = vpow.pop %v550
      %v552 = vsel %vm396, %v549, 0.0
      %553 = vadd.xlane.f32.xlu0 %v552
      %v554 = vpop.xlane.xlu0 %553
      %v555 = vsel %vm400, %v551, 0.0
      %556 = vadd.xlane.f32.xlu0 %v555
      %v557 = vpop.xlane.xlu0 %556
      %v558 = vrcp.pop %v554
      %v559 = vrcp.pop %v557
      %v560 = vmul.f32 %v549, %v558
      %v561 = vmul.f32 %v551, %v559
      %v562 = vpack.c.bf16 %v561, %v560
      %563 = vrot.lane.b32.xlu0 %v372, 48
      %v564 = vpop.permute.xlu0 %563
      %v566 = vsel %vm396, %v562, 0
      %v569 = vand.u32 %v564, %v429
      %571 = vmatpush.bf16.msra.mxu0 0
      %572 = vmatpush.bf16.msra.mxu0 0
      %573 = vmatpush.bf16.msra.mxu0 0
      %574 = vmatpush.bf16.msra.mxu0 0
      %575 = vmatpush.bf16.msra.mxu0 0
      %576 = vmatpush.bf16.msra.mxu0 0
      %577 = vmatpush.bf16.msra.mxu0 0
      %578 = vmatpush.bf16.msra.mxu0 %v569
      %579 = vmatmul.bf16.gmra.mxu0 %v566
      %v580 = vpop.f32.mrf.mxu0
      %v581 = vadd.f32 0.0, %v580
      %v582 = vpop.f32.mrf.mxu0
      %v583 = vadd.f32 0.0, %v582
      %584 = vdwg.mxu0
      %585 = vrot.lane.b32.xlu0 %v372, 104
      %v586 = vpop.permute.xlu0 %585
      %587 = vrot.lane.b32.xlu0 %v372, 72
      %v588 = vpop.permute.xlu0 %587
      %v590 = vsel %vm375, %v586, 0
      %v593 = vsel %vm375, %v588, 0
      %595 = vmatpush.bf16.xpose.msra.mxu0 0
      %596 = vmatpush.bf16.xpose.msra.mxu0 0
      %597 = vmatpush.bf16.xpose.msra.mxu0 0
      %598 = vmatpush.bf16.xpose.msra.mxu0 0
      %599 = vmatpush.bf16.xpose.msra.mxu0 0
      %600 = vmatpush.bf16.xpose.msra.mxu0 0
      %601 = vmatpush.bf16.xpose.msra.mxu0 0
      %602 = vmatpush.bf16.xpose.msra.mxu0 %v593
      %603 = vmatmul.bf16.gmra.mxu0 %v590
      %v604 = vpop.f32.mrf.mxu0
      %v605 = vadd.f32 %v366, %v604
      %v606 = vpop.f32.mrf.mxu0
      %v607 = vadd.f32 %v366, %v606
      %608 = vdwg.mxu0
      %v609 = vsel %vm396, %v605, -inf
      %610 = vmax.xlane.f32.xlu0 %v609
      %v611 = vpop.xlane.xlu0 %610
      %v612 = vsel %vm400, %v607, -inf
      %613 = vmax.xlane.f32.xlu0 %v612
      %v614 = vpop.xlane.xlu0 %613
      %v615 = vsub.f32 %v605, %v611
      %v616 = vsub.f32 %v607, %v614
      %v617 = vmul.f32 %v615, 1.442695
      %v618 = vpow.pop %v617
      %v619 = vmul.f32 %v616, 1.442695
      %v620 = vpow.pop %v619
      %v621 = vsel %vm396, %v618, 0.0
      %622 = vadd.xlane.f32.xlu0 %v621
      %v623 = vpop.xlane.xlu0 %622
      %v624 = vsel %vm400, %v620, 0.0
      %625 = vadd.xlane.f32.xlu0 %v624
      %v626 = vpop.xlane.xlu0 %625
      %v627 = vrcp.pop %v623
      %v628 = vrcp.pop %v626
      %v629 = vmul.f32 %v618, %v627
      %v630 = vmul.f32 %v620, %v628
      %v631 = vpack.c.bf16 %v630, %v629
      %632 = vrot.lane.b32.xlu0 %v372, 40
      %v633 = vpop.permute.xlu0 %632
      %v635 = vsel %vm396, %v631, 0
      %v638 = vand.u32 %v633, %v429
      %640 = vmatpush.bf16.msra.mxu0 0
      %641 = vmatpush.bf16.msra.mxu0 0
      %642 = vmatpush.bf16.msra.mxu0 0
      %643 = vmatpush.bf16.msra.mxu0 0
      %644 = vmatpush.bf16.msra.mxu0 0
      %645 = vmatpush.bf16.msra.mxu0 0
      %646 = vmatpush.bf16.msra.mxu0 0
      %647 = vmatpush.bf16.msra.mxu0 %v638
      %648 = vmatmul.bf16.gmra.mxu0 %v635
      %v649 = vpop.f32.mrf.mxu0
      %v650 = vadd.f32 0.0, %v649
      %v651 = vpop.f32.mrf.mxu0
      %v652 = vadd.f32 0.0, %v651
      %653 = vdwg.mxu0
      %656 = vrot.lane.b32.xlu0 %v512, 8
      %v657 = vpop.permute.xlu0 %656
      %658 = vrot.lane.b32.xlu0 %v514, 8
      %v659 = vpop.permute.xlu0 %658
      %664 = vrot.lane.b32.xlu0 %v581, 16
      %v665 = vpop.permute.xlu0 %664
      %666 = vrot.lane.b32.xlu0 %v583, 16
      %v667 = vpop.permute.xlu0 %666
      %672 = vrot.lane.b32.xlu0 %v650, 24
      %v673 = vpop.permute.xlu0 %672
      %674 = vrot.lane.b32.xlu0 %v652, 24
      %v675 = vpop.permute.xlu0 %674
      %v678 = vsel %vm375, %v443, %v657
      %v679 = vsel %vm375, %v445, %v659
      %vm680 = vcmask 130048
      %v681 = vsel %vm680, %v678, %v665
      %v682 = vsel %vm680, %v679, %v667
      %vm683 = vcmask 195584
      %v684 = vsel %vm683, %v681, %v673
      %v685 = vsel %vm683, %v682, %v675
      %v686 = vld [vmem:[%s5] sm:$0x1]
      %v688 = vperm.slane %v686, 0
      %v690 = vadd.f32 %v321, %v688
      %v691 = vadd.f32 %v322, %v688
      %v692 = vld [vmem:[%s4] sm:$0xf]
      %v693 = vld [vmem:[%s4 + $0x4] sm:$0xf]
      %v694 = vld [vmem:[%s4 + $0x8] sm:$0xf]
      %v695 = vld [vmem:[%s4 + $0xc] sm:$0xf]
      %v696 = vpack.c.bf16 %v685, %v684
      %v701 = vunpack.c.l.b16 %v692
      %v702 = vunpack.c.l.b16 %v693
      %v703 = vunpack.c.l.b16 %v694
      %v704 = vunpack.c.l.b16 %v695
      %v705 = vpack.c.b16 %v702, %v701
      %v706 = vpack.c.b16 %v704, %v703
      %v710 = vsel %vm345, %v696, 0
      %712 = vmatpush.bf16.msra.mxu0 0
      %713 = vmatpush.bf16.msra.mxu0 0
      %714 = vmatpush.bf16.msra.mxu0 0
      %715 = vmatpush.bf16.msra.mxu0 0
      %716 = vmatpush.bf16.msra.mxu0 0
      %717 = vmatpush.bf16.msra.mxu0 0
      %718 = vmatpush.bf16.msra.mxu0 %v706
      %719 = vmatpush.bf16.msra.mxu0 %v705
      %720 = vmatmul.bf16.gmra.mxu0 %v710
      %v721 = vpop.f32.mrf.mxu0
      %v722 = vadd.f32 0.0, %v721
      %v723 = vpop.f32.mrf.mxu0
      %v724 = vadd.f32 0.0, %v723
      %725 = vdwg.mxu0
      %v726 = vadd.f32 %v690, %v722
      %v727 = vadd.f32 %v691, %v724
      %v728 = vsel %vm345, %v726, 0.0
      %729 = vadd.xlane.f32.xlu0 %v728
      %v730 = vpop.xlane.xlu0 %729
      %vm731 = vcmask 253952
      %v732 = vsel %vm731, %v727, 0.0
      %733 = vadd.xlane.f32.xlu0 %v732
      %v734 = vpop.xlane.xlu0 %733
      %v735 = vrcp.pop 32.0
      %v736 = vmul.f32 32.0, %v735
      %v737 = vsub.f32 1.0, %v736
      %v738 = vmul.f32 %v735, %v737
      %v739 = vadd.f32 %v735, %v738
      %vm740 = vweird.f32 %v735
      %v741 = vsel %vm740, %v735, %v739
      %v742 = vmul.f32 %v730, %v741
      %v743 = vmul.f32 %v734, %v741
      %v744 = vsub.f32 %v726, %v742
      %v745 = vsub.f32 %v727, %v743
      %v746 = vmul.f32 %v744, %v744
      %v747 = vmul.f32 %v745, %v745
      %v748 = vsel %vm345, %v746, 0.0
      %749 = vadd.xlane.f32.xlu0 %v748
      %v750 = vpop.xlane.xlu0 %749
      %v751 = vsel %vm731, %v747, 0.0
      %752 = vadd.xlane.f32.xlu0 %v751
      %v753 = vpop.xlane.xlu0 %752
      %v754 = vmul.f32 %v750, %v741
      %v755 = vmul.f32 %v753, %v741
      %v756 = vadd.f32 %v754, 1e-12
      %v757 = vadd.f32 %v755, 1e-12
      %v758 = vrsqrt.pop %v756
      %v759 = vmul.f32 %v758, %v756
      %v760 = vmul.f32 %v759, %v758
      %v761 = vmul.f32 0.5, %v760
      %v762 = vsub.f32 1.5, %v761
      %v763 = vmul.f32 %v758, %v762
      %vm764 = vweird.f32 %v756
      %vm765 = vweird.f32 %v758
      %vm766 = vmor %vm764, %vm765
      %v767 = vsel %vm766, %v758, %v763
      %v768 = vrsqrt.pop %v757
      %v769 = vmul.f32 %v768, %v757
      %v770 = vmul.f32 %v769, %v768
      %v771 = vmul.f32 0.5, %v770
      %v772 = vsub.f32 1.5, %v771
      %v773 = vmul.f32 %v768, %v772
      %vm774 = vweird.f32 %v757
      %vm775 = vweird.f32 %v768
      %vm776 = vmor %vm774, %vm775
      %v777 = vsel %vm776, %v768, %v773
      %v778 = vmul.f32 %v744, %v767
      %v779 = vmul.f32 %v745, %v777
      %v780 = vld [vmem:[%s6] sm:$0x1]
      %v782 = vperm.slane %v780, 0
      %v784 = vmul.f32 %v778, %v782
      %v785 = vmul.f32 %v779, %v782
      %v786 = vld [vmem:[%s7] sm:$0x1]
      %v788 = vperm.slane %v786, 0
      %v790 = vadd.f32 %v784, %v788
      %v791 = vadd.f32 %v785, %v788
      %792 = vst.msk [vmem:[%s319] sm:$0xff] %vm345, %v790
      %793 = vst.msk [vmem:[%s319 + $0x8] sm:$0x1] %vm731, %v791
      %p794 = scmp.lt.s32.totalorder %s19, 1
      %s795 = scalar_select %p794, %s19, 1
      %s796 = smul.addr %s795, 2
      %s797 = smul.addr %s796, 8
      %s798 = scalar_lea.vmem %s8, %s797
      // Predicated region
      $region53: #{distil_bert_lstm_forward.8} parent=51 // pred_check
        %p799 = pneg %p215
      $region54: #{distil_bert_lstm_forward.8} parent=51 // pred_check_branch
        %801 = sbr.rel (%p799) target = $region56
      $region55: #{distil_bert_lstm_forward.8} parent=51 // pred_region
        _
      $region56: #{distil_bert_lstm_forward.8} parent=51 // pred_fallthru
        _
    $region52: #{distil_bert_lstm_forward.8} parent=5 // pred_fallthru
      _
    %p802 = scmp.le.s32.totalorder 2, %s14
    // Predicated region
    $region57: #{distil_bert_lstm_forward.8} parent=5 // pred_check
      %p803 = pneg %p802
    $region58: #{distil_bert_lstm_forward.8} parent=5 // pred_check_branch
      %805 = sbr.rel (%p803) target = $region60
    $region59: #{distil_bert_lstm_forward.8} parent=5 // pred_region
      %s806 = ssub.s32 %s14, 2
      // Predicated region
      $region61: #{distil_bert_lstm_forward.8} parent=59 // pred_check
        %p807 = pneg %p221
      $region62: #{distil_bert_lstm_forward.8} parent=59 // pred_check_branch
        %809 = sbr.rel (%p807) target = $region64
      $region63: #{distil_bert_lstm_forward.8} parent=59 // pred_region
        %p810 = scmp.lt.s32.totalorder %s20, 1
        %s811 = scalar_select %p810, %s20, 1
        %s812 = smul.addr %s811, 2
        %s813 = smul.addr %s812, 8
        %s814 = scalar_lea.vmem %s8, %s813
      $region64: #{distil_bert_lstm_forward.8} parent=59 // pred_fallthru
        _
    $region60: #{distil_bert_lstm_forward.8} parent=5 // pred_fallthru
      _
  $region6: #{distil_bert_lstm_forward.8} parent=0 // loop_footer
    %s18 = sadd.s32 1, %s14
  $region7: #{distil_bert_lstm_forward.8} parent=0 // loop_footer_branch
    %13 = sbr.rel target = $region3
  $region8: #{distil_bert_lstm_forward.8} parent=0 // loop_exit
    _

// kernel: distil_bert_lstm_forward.12
$region0: #{distil_bert_lstm_forward.12}
  #allocation0 [shape = 'u32[]', space=smem, size = 0x4, offset = 0x4, fixed_abs, tag = 'smem constant byte address 0x4 - core index']
  #allocation1 [shape = 'u32[72,128]{1,0:T(1,128)}', space=vmem, size = 0x9000, scoped, tag = 'internal scratch']
  %s0 = inlined_call_operand.vmem [shape: f32[16,32], index: 0, kind: input, shape index: {}]
  %s1 = inlined_call_operand.vmem [shape: bf16[32,128], index: 1, kind: input, shape index: {}]
  %s2 = inlined_call_operand.vmem [shape: f32[1,128], index: 2, kind: input, shape index: {}]
  %s3 = inlined_call_operand.vmem [shape: f32[16,128], index: 3, kind: output, shape index: {}]
  %s4 = sld [smem:[#allocation0]]
  $region22: #{distil_bert_lstm_forward.12} parent=0
    _
  %s6 = ssub.s32 1, %s4
  %s7 = scalar_select 0, %s6, %s4
  // Predicated region
  $region2: #{distil_bert_lstm_forward.12} parent=0 // pred_check
    _
  $region3: #{distil_bert_lstm_forward.12} parent=0 // pred_check_branch
    %9 = sbr.rel (0) target = $region5
  $region4: #{distil_bert_lstm_forward.12} parent=0 // pred_region
    _
  $region5: #{distil_bert_lstm_forward.12} parent=0 // pred_fallthru
    _
  // Predicated region
  $region6: #{distil_bert_lstm_forward.12} parent=0 // pred_check
    _
  $region7: #{distil_bert_lstm_forward.12} parent=0 // pred_check_branch
    %11 = sbr.rel (0) target = $region9
  $region8: #{distil_bert_lstm_forward.12} parent=0 // pred_region
    _
  $region9: #{distil_bert_lstm_forward.12} parent=0 // pred_fallthru
    _
  // Predicated region
  $region10: #{distil_bert_lstm_forward.12} parent=0 // pred_check
    _
  $region11: #{distil_bert_lstm_forward.12} parent=0 // pred_check_branch
    %13 = sbr.rel (0) target = $region13
  $region12: #{distil_bert_lstm_forward.12} parent=0 // pred_region
    _
  $region13: #{distil_bert_lstm_forward.12} parent=0 // pred_fallthru
    _
  %v15 = vld [vmem:[%s0] sm:$0xff]
  %v16 = vld [vmem:[%s0 + $0x8] sm:$0xff]
  %v17 = vld [vmem:[%s1] sm:$0xf]
  %v18 = vld [vmem:[%s1 + $0x4] sm:$0xf]
  %v19 = vld [vmem:[%s1 + $0x8] sm:$0xf]
  %v20 = vld [vmem:[%s1 + $0xc] sm:$0xf]
  %v21 = vpack.c.bf16 %v16, %v15
  %v22 = vld [vmem:[%s2] sm:$0x1]
  %v24 = vperm.slane %v22, 0
  %v30 = vunpack.c.l.b16 %v17
  %v31 = vunpack.c.l.b16 %v18
  %v32 = vunpack.c.l.b16 %v19
  %v33 = vunpack.c.l.b16 %v20
  %v34 = vpack.c.b16 %v31, %v30
  %v35 = vpack.c.b16 %v33, %v32
  %vm38 = vcmask 261120
  %v40 = vsel %vm38, %v21, 0
  %42 = vmatpush.bf16.msra.mxu0 0
  %43 = vmatpush.bf16.msra.mxu0 0
  %44 = vmatpush.bf16.msra.mxu0 0
  %45 = vmatpush.bf16.msra.mxu0 0
  %46 = vmatpush.bf16.msra.mxu0 0
  %47 = vmatpush.bf16.msra.mxu0 0
  %48 = vmatpush.bf16.msra.mxu0 %v35
  %49 = vmatpush.bf16.msra.mxu0 %v34
  %50 = vmatmul.bf16.gmra.mxu0 %v40
  %v51 = vpop.f32.mrf.mxu0
  %v52 = vadd.f32 %v24, %v51
  %v53 = vpop.f32.mrf.mxu0
  %v54 = vadd.f32 %v24, %v53
  %55 = vdwg.mxu0
  %56 = vst [vmem:[%s3] sm:$0xff] %v52
  %57 = vst [vmem:[%s3 + $0x8] sm:$0xff] %v54
  // Predicated region
  $region14: #{distil_bert_lstm_forward.12} parent=0 // pred_check
    _
  $region15: #{distil_bert_lstm_forward.12} parent=0 // pred_check_branch
    %59 = sbr.rel (0) target = $region17
  $region16: #{distil_bert_lstm_forward.12} parent=0 // pred_region
    _
  $region17: #{distil_bert_lstm_forward.12} parent=0 // pred_fallthru
    _
  // Predicated region
  $region18: #{distil_bert_lstm_forward.12} parent=0 // pred_check
    _
  $region19: #{distil_bert_lstm_forward.12} parent=0 // pred_check_branch
    %61 = sbr.rel (0) target = $region21
  $region20: #{distil_bert_lstm_forward.12} parent=0 // pred_region
    _
  $region21: #{distil_bert_lstm_forward.12} parent=0 // pred_fallthru
    _

// kernel: distil_bert_lstm_forward.9
$region0: #{distil_bert_lstm_forward.9}
  #allocation0 [shape = 'u32[]', space=smem, size = 0x4, offset = 0x4, fixed_abs, tag = 'smem constant byte address 0x4 - core index']
  #allocation1 [shape = 'u32[72,128]{1,0:T(1,128)}', space=vmem, size = 0x9000, scoped, tag = 'internal scratch']
  %s0 = inlined_call_operand.vmem [shape: f32[18,32], index: 0, kind: input, shape index: {}]
  %s1 = inlined_call_operand.vmem [shape: bf16[32,64], index: 1, kind: input, shape index: {}]
  %s2 = inlined_call_operand.vmem [shape: f32[1,64], index: 2, kind: input, shape index: {}]
  %s3 = inlined_call_operand.vmem [shape: bf16[64,32], index: 3, kind: input, shape index: {}]
  %s4 = inlined_call_operand.vmem [shape: f32[1,32], index: 4, kind: input, shape index: {}]
  %s5 = inlined_call_operand.vmem [shape: f32[1,32], index: 5, kind: input, shape index: {}]
  %s6 = inlined_call_operand.vmem [shape: f32[1,32], index: 6, kind: input, shape index: {}]
  %s7 = inlined_call_operand.vmem [shape: f32[18,32], index: 7, kind: output, shape index: {}]
  %s8 = sld [smem:[#allocation0]]
  $region38: #{distil_bert_lstm_forward.9} parent=0
    _
  %s10 = ssub.s32 1, %s8
  %s11 = scalar_select 0, %s10, %s8
  // Predicated region
  $region2: #{distil_bert_lstm_forward.9} parent=0 // pred_check
    _
  $region3: #{distil_bert_lstm_forward.9} parent=0 // pred_check_branch
    %13 = sbr.rel (0) target = $region5
  $region4: #{distil_bert_lstm_forward.9} parent=0 // pred_region
    _
  $region5: #{distil_bert_lstm_forward.9} parent=0 // pred_fallthru
    _
  // Predicated region
  $region6: #{distil_bert_lstm_forward.9} parent=0 // pred_check
    _
  $region7: #{distil_bert_lstm_forward.9} parent=0 // pred_check_branch
    %15 = sbr.rel (0) target = $region9
  $region8: #{distil_bert_lstm_forward.9} parent=0 // pred_region
    _
  $region9: #{distil_bert_lstm_forward.9} parent=0 // pred_fallthru
    _
  // Predicated region
  $region10: #{distil_bert_lstm_forward.9} parent=0 // pred_check
    _
  $region11: #{distil_bert_lstm_forward.9} parent=0 // pred_check_branch
    %17 = sbr.rel (0) target = $region13
  $region12: #{distil_bert_lstm_forward.9} parent=0 // pred_region
    _
  $region13: #{distil_bert_lstm_forward.9} parent=0 // pred_fallthru
    _
  // Predicated region
  $region14: #{distil_bert_lstm_forward.9} parent=0 // pred_check
    _
  $region15: #{distil_bert_lstm_forward.9} parent=0 // pred_check_branch
    %19 = sbr.rel (0) target = $region17
  $region16: #{distil_bert_lstm_forward.9} parent=0 // pred_region
    _
  $region17: #{distil_bert_lstm_forward.9} parent=0 // pred_fallthru
    _
  // Predicated region
  $region18: #{distil_bert_lstm_forward.9} parent=0 // pred_check
    _
  $region19: #{distil_bert_lstm_forward.9} parent=0 // pred_check_branch
    %21 = sbr.rel (0) target = $region21
  $region20: #{distil_bert_lstm_forward.9} parent=0 // pred_region
    _
  $region21: #{distil_bert_lstm_forward.9} parent=0 // pred_fallthru
    _
  // Predicated region
  $region22: #{distil_bert_lstm_forward.9} parent=0 // pred_check
    _
  $region23: #{distil_bert_lstm_forward.9} parent=0 // pred_check_branch
    %23 = sbr.rel (0) target = $region25
  $region24: #{distil_bert_lstm_forward.9} parent=0 // pred_region
    _
  $region25: #{distil_bert_lstm_forward.9} parent=0 // pred_fallthru
    _
  // Predicated region
  $region26: #{distil_bert_lstm_forward.9} parent=0 // pred_check
    _
  $region27: #{distil_bert_lstm_forward.9} parent=0 // pred_check_branch
    %25 = sbr.rel (0) target = $region29
  $region28: #{distil_bert_lstm_forward.9} parent=0 // pred_region
    _
  $region29: #{distil_bert_lstm_forward.9} parent=0 // pred_fallthru
    _
  %v27 = vld [vmem:[%s0] sm:$0xff]
  %v28 = vld [vmem:[%s0 + $0x8] sm:$0xff]
  %v29 = vld [vmem:[%s0 + $0x10] sm:$0x3]
  %v30 = vld [vmem:[%s1] sm:$0xf]
  %v31 = vld [vmem:[%s1 + $0x4] sm:$0xf]
  %v32 = vld [vmem:[%s1 + $0x8] sm:$0xf]
  %v33 = vld [vmem:[%s1 + $0xc] sm:$0xf]
  %v34 = vpack.c.bf16 %v28, %v27
  %v35 = vpack.c.bf16 %v29, %v29
  %v36 = vld [vmem:[%s2] sm:$0x1]
  %v38 = vperm.slane %v36, 0
  %v44 = vunpack.c.l.b16 %v30
  %v45 = vunpack.c.l.b16 %v31
  %v46 = vunpack.c.l.b16 %v32
  %v47 = vunpack.c.l.b16 %v33
  %v48 = vpack.c.b16 %v45, %v44
  %v49 = vpack.c.b16 %v47, %v46
  %vm52 = vcmask 261120
  %v54 = vsel %vm52, %v34, 0
  %v57 = vsel %vm52, %v35, 0
  %59 = vmatpush.bf16.msra.mxu0 0
  %60 = vmatpush.bf16.msra.mxu0 0
  %61 = vmatpush.bf16.msra.mxu0 0
  %62 = vmatpush.bf16.msra.mxu0 0
  %63 = vmatpush.bf16.msra.mxu0 0
  %64 = vmatpush.bf16.msra.mxu0 0
  %65 = vmatpush.bf16.msra.mxu0 %v49
  %66 = vmatpush.bf16.msra.mxu0 %v48
  %67 = vmatmul.bf16.gmra.mxu0 %v54
  %v68 = vpop.f32.mrf.mxu0
  %v69 = vadd.f32 %v38, %v68
  %v70 = vpop.f32.mrf.mxu0
  %v71 = vadd.f32 %v38, %v70
  %72 = vmatmul.bf16.gmra.mxu0 %v57
  %v73 = vpop.f32.mrf.mxu0
  %v74 = vadd.f32 %v38, %v73
  %v75 = vpop.f32.mrf.mxu0
  %76 = vdwg.mxu0
  %v77 = vmul.f32 %v69, %v69
  %v78 = vmul.f32 %v71, %v71
  %v79 = vmul.f32 %v74, %v74
  %v80 = vmul.f32 %v69, %v77
  %v81 = vmul.f32 %v71, %v78
  %v82 = vmul.f32 %v74, %v79
  %v83 = vmul.f32 %v80, 0.044715
  %v84 = vmul.f32 %v81, 0.044715
  %v85 = vmul.f32 %v82, 0.044715
  %v86 = vadd.f32 %v69, %v83
  %v87 = vadd.f32 %v71, %v84
  %v88 = vadd.f32 %v74, %v85
  %v89 = vmul.f32 %v86, 0.7978846
  %v90 = vmul.f32 %v87, 0.7978846
  %v91 = vmul.f32 %v88, 0.7978846
  %v92 = vtanh.pop %v89
  %v93 = vtanh.pop %v90
  %v94 = vtanh.pop %v91
  %v95 = vadd.f32 %v92, 1.0
  %v96 = vadd.f32 %v93, 1.0
  %v97 = vadd.f32 %v94, 1.0
  %v98 = vmul.f32 %v95, 0.5
  %v99 = vmul.f32 %v96, 0.5
  %v100 = vmul.f32 %v97, 0.5
  %v101 = vmul.f32 %v69, %v98
  %v102 = vmul.f32 %v71, %v99
  %v103 = vmul.f32 %v74, %v100
  %v104 = vld [vmem:[%s3] sm:$0xf]
  %v105 = vld [vmem:[%s3 + $0x4] sm:$0xf]
  %v106 = vld [vmem:[%s3 + $0x8] sm:$0xf]
  %v107 = vld [vmem:[%s3 + $0xc] sm:$0xf]
  %v108 = vld [vmem:[%s3 + $0x10] sm:$0xf]
  %v109 = vld [vmem:[%s3 + $0x14] sm:$0xf]
  %v110 = vld [vmem:[%s3 + $0x18] sm:$0xf]
  %v111 = vld [vmem:[%s3 + $0x1c] sm:$0xf]
  %v112 = vpack.c.bf16 %v102, %v101
  %v113 = vpack.c.bf16 %v103, %v103
  %v122 = vunpack.c.l.b16 %v104
  %v123 = vunpack.c.l.b16 %v105
  %v124 = vunpack.c.l.b16 %v106
  %v125 = vunpack.c.l.b16 %v107
  %v126 = vunpack.c.l.b16 %v108
  %v127 = vunpack.c.l.b16 %v109
  %v128 = vunpack.c.l.b16 %v110
  %v129 = vunpack.c.l.b16 %v111
  %v130 = vpack.c.b16 %v123, %v122
  %v131 = vpack.c.b16 %v125, %v124
  %v132 = vpack.c.b16 %v127, %v126
  %v133 = vpack.c.b16 %v129, %v128
  %vm138 = vcmask 523264
  %v140 = vsel %vm138, %v112, 0
  %v143 = vsel %vm138, %v113, 0
  %145 = vmatpush.bf16.msra.mxu0 0
  %146 = vmatpush.bf16.msra.mxu0 0
  %147 = vmatpush.bf16.msra.mxu0 0
  %148 = vmatpush.bf16.msra.mxu0 0
  %149 = vmatpush.bf16.msra.mxu0 %v133
  %150 = vmatpush.bf16.msra.mxu0 %v132
  %151 = vmatpush.bf16.msra.mxu0 %v131
  %152 = vmatpush.bf16.msra.mxu0 %v130
  %153 = vmatmul.bf16.gmra.mxu0 %v140
  %v154 = vpop.f32.mrf.mxu0
  %v155 = vadd.f32 0.0, %v154
  %v156 = vpop.f32.mrf.mxu0
  %v157 = vadd.f32 0.0, %v156
  %158 = vmatmul.bf16.gmra.mxu0 %v143
  %v159 = vpop.f32.mrf.mxu0
  %v160 = vadd.f32 0.0, %v159
  %v161 = vpop.f32.mrf.mxu0
  %162 = vdwg.mxu0
  %v163 = vadd.f32 %v27, %v155
  %v164 = vadd.f32 %v28, %v157
  %v165 = vadd.f32 %v29, %v160
  %v166 = vld [vmem:[%s4] sm:$0x1]
  %v168 = vperm.slane %v166, 0
  %v170 = vadd.f32 %v163, %v168
  %v171 = vadd.f32 %v164, %v168
  %v172 = vadd.f32 %v165, %v168
  %v173 = vsel %vm52, %v170, 0.0
  %174 = vadd.xlane.f32.xlu0 %v173
  %v175 = vpop.xlane.xlu0 %174
  %v176 = vsel %vm52, %v171, 0.0
  %177 = vadd.xlane.f32.xlu0 %v176
  %v178 = vpop.xlane.xlu0 %177
  %vm179 = vcmask 254976
  %v180 = vsel %vm179, %v172, 0.0
  %181 = vadd.xlane.f32.xlu0 %v180
  %v182 = vpop.xlane.xlu0 %181
  %v183 = vrcp.pop 32.0
  %v184 = vmul.f32 32.0, %v183
  %v185 = vsub.f32 1.0, %v184
  %v186 = vmul.f32 %v183, %v185
  %v187 = vadd.f32 %v183, %v186
  %vm188 = vweird.f32 %v183
  %v189 = vsel %vm188, %v183, %v187
  %v190 = vmul.f32 %v175, %v189
  %v191 = vmul.f32 %v178, %v189
  %v192 = vmul.f32 %v182, %v189
  %v193 = vsub.f32 %v170, %v190
  %v194 = vsub.f32 %v171, %v191
  %v195 = vsub.f32 %v172, %v192
  %v196 = vmul.f32 %v193, %v193
  %v197 = vmul.f32 %v194, %v194
  %v198 = vmul.f32 %v195, %v195
  %v199 = vsel %vm52, %v196, 0.0
  %200 = vadd.xlane.f32.xlu0 %v199
  %v201 = vpop.xlane.xlu0 %200
  %v202 = vsel %vm52, %v197, 0.0
  %203 = vadd.xlane.f32.xlu0 %v202
  %v204 = vpop.xlane.xlu0 %203
  %v205 = vsel %vm179, %v198, 0.0
  %206 = vadd.xlane.f32.xlu0 %v205
  %v207 = vpop.xlane.xlu0 %206
  %v208 = vmul.f32 %v201, %v189
  %v209 = vmul.f32 %v204, %v189
  %v210 = vmul.f32 %v207, %v189
  %v211 = vadd.f32 %v208, 1e-12
  %v212 = vadd.f32 %v209, 1e-12
  %v213 = vadd.f32 %v210, 1e-12
  %v214 = vrsqrt.pop %v211
  %v215 = vmul.f32 %v214, %v211
  %v216 = vmul.f32 %v215, %v214
  %v217 = vmul.f32 0.5, %v216
  %v218 = vsub.f32 1.5, %v217
  %v219 = vmul.f32 %v214, %v218
  %vm220 = vweird.f32 %v211
  %vm221 = vweird.f32 %v214
  %vm222 = vmor %vm220, %vm221
  %v223 = vsel %vm222, %v214, %v219
  %v224 = vrsqrt.pop %v212
  %v225 = vmul.f32 %v224, %v212
  %v226 = vmul.f32 %v225, %v224
  %v227 = vmul.f32 0.5, %v226
  %v228 = vsub.f32 1.5, %v227
  %v229 = vmul.f32 %v224, %v228
  %vm230 = vweird.f32 %v212
  %vm231 = vweird.f32 %v224
  %vm232 = vmor %vm230, %vm231
  %v233 = vsel %vm232, %v224, %v229
  %v234 = vrsqrt.pop %v213
  %v235 = vmul.f32 %v234, %v213
  %v236 = vmul.f32 %v235, %v234
  %v237 = vmul.f32 0.5, %v236
  %v238 = vsub.f32 1.5, %v237
  %v239 = vmul.f32 %v234, %v238
  %vm240 = vweird.f32 %v213
  %vm241 = vweird.f32 %v234
  %vm242 = vmor %vm240, %vm241
  %v243 = vsel %vm242, %v234, %v239
  %v244 = vmul.f32 %v193, %v223
  %v245 = vmul.f32 %v194, %v233
  %v246 = vmul.f32 %v195, %v243
  %v247 = vld [vmem:[%s5] sm:$0x1]
  %v249 = vperm.slane %v247, 0
  %v251 = vmul.f32 %v244, %v249
  %v252 = vmul.f32 %v245, %v249
  %v253 = vmul.f32 %v246, %v249
  %v254 = vld [vmem:[%s6] sm:$0x1]
  %v256 = vperm.slane %v254, 0
  %v258 = vadd.f32 %v251, %v256
  %v259 = vadd.f32 %v252, %v256
  %v260 = vadd.f32 %v253, %v256
  %261 = vst.msk [vmem:[%s7] sm:$0xff] %vm52, %v258
  %262 = vst.msk [vmem:[%s7 + $0x8] sm:$0xff] %vm52, %v259
  %263 = vst.msk [vmem:[%s7 + $0x10] sm:$0x3] %vm179, %v260
  // Predicated region
  $region30: #{distil_bert_lstm_forward.9} parent=0 // pred_check
    _
  $region31: #{distil_bert_lstm_forward.9} parent=0 // pred_check_branch
    %265 = sbr.rel (0) target = $region33
  $region32: #{distil_bert_lstm_forward.9} parent=0 // pred_region
    _
  $region33: #{distil_bert_lstm_forward.9} parent=0 // pred_fallthru
    _
  // Predicated region
  $region34: #{distil_bert_lstm_forward.9} parent=0 // pred_check
    _
  $region35: #{distil_bert_lstm_forward.9} parent=0 // pred_check_branch
    %267 = sbr.rel (0) target = $region37
  $region36: #{distil_bert_lstm_forward.9} parent=0 // pred_region
    _
  $region37: #{distil_bert_lstm_forward.9} parent=0 // pred_fallthru
    _

// kernel: distil_bert_lstm_forward.13
$region0: #{distil_bert_lstm_forward.13}
  #allocation0 [shape = 'u32[]', space=smem, size = 0x4, offset = 0x4, fixed_abs, tag = 'smem constant byte address 0x4 - core index']
  #allocation1 [shape = 'u32[72,128]{1,0:T(1,128)}', space=vmem, size = 0x9000, scoped, tag = 'internal scratch']
  #allocation2 [shape = 'f32[2,32]{1,0:T(2,128)}', space=vmem, size = 0x400, scoped, tag = 'scratch operand']
  #allocation3 [shape = 'f32[2,32]{1,0:T(2,128)}', space=vmem, size = 0x400, scoped, tag = 'scratch operand']
  #allocation4 [shape = 'f32[2,3]{1,0:T(2,128)}', space=vmem, size = 0x400, scoped, tag = 'scratch operand']
  %s0 = inlined_call_operand.vmem [shape: f32[8,2,128], index: 0, kind: input, shape index: {}]
  %s1 = inlined_call_operand.vmem [shape: bf16[32,128], index: 1, kind: input, shape index: {}]
  %s2 = inlined_call_operand.vmem [shape: bf16[256,3], index: 2, kind: input, shape index: {}]
  %s3 = inlined_call_operand.vmem [shape: f32[1,3], index: 3, kind: input, shape index: {}]
  %s4 = inlined_call_operand.hbm [shape: f32[2,3], index: 4, kind: output, shape index: {}]
  %s5 = sld [smem:[#allocation0]]
  $region57: #{distil_bert_lstm_forward.13} parent=0
    _
  %s7 = ssub.s32 1, %s5
  %s8 = scalar_select 0, %s7, %s5
  $region1: #{distil_bert_lstm_forward.13} parent=0
    #allocation5 [shape = 'u8[1024]{0}', space=vmem, size = 0x400, scoped, tag = 'output window, operand 0, single buffered']
    #allocation6 [shape = 's32[2]{0}', space=sflag, size = 0x8, scoped, tag = 'scoped memory for distil_bert_lstm_forward.13']
    %9 = vsyncpa [#allocation6], 0
    loop: start=0, step=1, limit=10
    $region2: #{distil_bert_lstm_forward.13} parent=1 // loop_pre_header
      _
    $region3: #{distil_bert_lstm_forward.13} parent=1 // loop_header
      %s11 = sphi 0, %s15
      %p12 = scmp.ge.s32.totalorder %s11, 10
      %s21 = sphi 0, %s23
      %s24 = sphi 0, %s21
      %s25 = sphi 0, %s24
      %s41 = sphi 0, %s25
      %s45 = sphi 0, %s45
      %s47 = sphi 0, %s45
      %s48 = sphi 0, %s47
      %s62 = sphi 0, %s48
      %s68 = sphi 0, %s70
      %s71 = sphi 0, %s68
      %s72 = sphi 0, %s71
      %s88 = sphi 0, %s72
      %s92 = sphi 0, %s92
      %s94 = sphi 0, %s92
      %s95 = sphi 0, %s94
      %s109 = sphi 0, %s95
      %s113 = sphi 0, %s113
      %s115 = sphi 0, %s113
      %s116 = sphi 0, %s115
      %s130 = sphi 0, %s116
    $region4: #{distil_bert_lstm_forward.13} parent=1 // loop_header_branch
      %14 = sbr.rel (%p12) target = $region8
    $region5: #{distil_bert_lstm_forward.13} parent=1 // loop_body
      %s16 = ssub.s32 %s11, 1
      %s17 = ssub.s32 %s11, 2
      %s18 = sadd.s32 %s11, 1
      %s19 = ssub.s32 %s11, %s18
      %p20 = scmp.eq.s32.totalorder %s19, 0
      %s22 = sadd.s32 %s21, 1
      %s23 = scalar_select %p20, %s21, %s22
      %p26 = pneg %p20
      %p27 = scmp.eq.s32.totalorder %s11, 7
      %p28 = por %p26, %p27
      %p29 = scmp.ne.s32.totalorder %s21, %s24
      %p30 = scmp.eq.s32.totalorder %s11, 0
      %p31 = por %p29, %p30
      %p32 = scmp.ne.s32.totalorder %s21, %s24
      %p33 = scmp.eq.s32.totalorder %s16, 7
      %p34 = por %p32, %p33
      %p35 = scmp.ne.s32.totalorder %s24, %s25
      %p36 = scmp.eq.s32.totalorder %s16, 0
      %p37 = por %p35, %p36
      %p38 = scmp.ne.s32.totalorder %s24, %s25
      %p39 = scmp.eq.s32.totalorder %s17, 7
      %p40 = por %p38, %p39
      %p42 = scmp.ne.s32.totalorder %s25, %s41
      %p43 = scmp.eq.s32.totalorder %s17, 0
      %p44 = por %p42, %p43
      %s46 = sadd.s32 %s45, 1
      %p49 = scmp.eq.s32.totalorder %s11, 7
      %p50 = scmp.ne.s32.totalorder %s45, %s47
      %p51 = scmp.eq.s32.totalorder %s11, 0
      %p52 = por %p50, %p51
      %p53 = scmp.ne.s32.totalorder %s45, %s47
      %p54 = scmp.eq.s32.totalorder %s16, 7
      %p55 = por %p53, %p54
      %p56 = scmp.ne.s32.totalorder %s47, %s48
      %p57 = scmp.eq.s32.totalorder %s16, 0
      %p58 = por %p56, %p57
      %p59 = scmp.ne.s32.totalorder %s47, %s48
      %p60 = scmp.eq.s32.totalorder %s17, 7
      %p61 = por %p59, %p60
      %p63 = scmp.ne.s32.totalorder %s48, %s62
      %p64 = scmp.eq.s32.totalorder %s17, 0
      %p65 = por %p63, %p64
      %s66 = ssub.s32 %s11, %s18
      %p67 = scmp.eq.s32.totalorder %s66, 0
      %s69 = sadd.s32 %s68, 1
      %s70 = scalar_select %p67, %s68, %s69
      %p73 = pneg %p67
      %p74 = scmp.eq.s32.totalorder %s11, 7
      %p75 = por %p73, %p74
      %p76 = scmp.ne.s32.totalorder %s68, %s71
      %p77 = scmp.eq.s32.totalorder %s11, 0
      %p78 = por %p76, %p77
      %p79 = scmp.ne.s32.totalorder %s68, %s71
      %p80 = scmp.eq.s32.totalorder %s16, 7
      %p81 = por %p79, %p80
      %p82 = scmp.ne.s32.totalorder %s71, %s72
      %p83 = scmp.eq.s32.totalorder %s16, 0
      %p84 = por %p82, %p83
      %p85 = scmp.ne.s32.totalorder %s71, %s72
      %p86 = scmp.eq.s32.totalorder %s17, 7
      %p87 = por %p85, %p86
      %p89 = scmp.ne.s32.totalorder %s72, %s88
      %p90 = scmp.eq.s32.totalorder %s17, 0
      %p91 = por %p89, %p90
      %s93 = sadd.s32 %s92, 1
      %p96 = scmp.eq.s32.totalorder %s11, 7
      %p97 = scmp.ne.s32.totalorder %s92, %s94
      %p98 = scmp.eq.s32.totalorder %s11, 0
      %p99 = por %p97, %p98
      %p100 = scmp.ne.s32.totalorder %s92, %s94
      %p101 = scmp.eq.s32.totalorder %s16, 7
      %p102 = por %p100, %p101
      %p103 = scmp.ne.s32.totalorder %s94, %s95
      %p104 = scmp.eq.s32.totalorder %s16, 0
      %p105 = por %p103, %p104
      %p106 = scmp.ne.s32.totalorder %s94, %s95
      %p107 = scmp.eq.s32.totalorder %s17, 7
      %p108 = por %p106, %p107
      %p110 = scmp.ne.s32.totalorder %s95, %s109
      %p111 = scmp.eq.s32.totalorder %s17, 0
      %p112 = por %p110, %p111
      %s114 = sadd.s32 %s113, 1
      %p117 = scmp.eq.s32.totalorder %s11, 7
      %p118 = scmp.ne.s32.totalorder %s113, %s115
      %p119 = scmp.eq.s32.totalorder %s11, 0
      %p120 = por %p118, %p119
      %p121 = scmp.ne.s32.totalorder %s113, %s115
      %p122 = scmp.eq.s32.totalorder %s16, 7
      %p123 = por %p121, %p122
      %p124 = scmp.ne.s32.totalorder %s115, %s116
      %p125 = scmp.eq.s32.totalorder %s16, 0
      %p126 = por %p124, %p125
      %p127 = scmp.ne.s32.totalorder %s115, %s116
      %p128 = scmp.eq.s32.totalorder %s17, 7
      %p129 = por %p127, %p128
      %p131 = scmp.ne.s32.totalorder %s116, %s130
      %p132 = scmp.eq.s32.totalorder %s17, 0
      %p133 = por %p131, %p132
      %p134 = scmp.le.s32.totalorder 1, %s11
      %p135 = scmp.lt.s32.totalorder %s11, 9
      %p136 = pnand %p134, %p135
      %p137 = pneg %p136
      // Predicated region
      $region9: #{distil_bert_lstm_forward.13} parent=5 // pred_check
        _
      $region10: #{distil_bert_lstm_forward.13} parent=5 // pred_check_branch
        %139 = sbr.rel (%p136) target = $region12
      $region11: #{distil_bert_lstm_forward.13} parent=5 // pred_region
        %s140 = ssub.s32 %s11, 1
        // Predicated region
        $region13: #{distil_bert_lstm_forward.13} parent=11 // pred_check
          %p141 = pneg %p58
        $region14: #{distil_bert_lstm_forward.13} parent=11 // pred_check_branch
          %143 = sbr.rel (%p141) target = $region16
        $region15: #{distil_bert_lstm_forward.13} parent=11 // pred_region
          _
        $region16: #{distil_bert_lstm_forward.13} parent=11 // pred_fallthru
          _
        // Predicated region
        $region17: #{distil_bert_lstm_forward.13} parent=11 // pred_check
          %p144 = pneg %p105
        $region18: #{distil_bert_lstm_forward.13} parent=11 // pred_check_branch
          %146 = sbr.rel (%p144) target = $region20
        $region19: #{distil_bert_lstm_forward.13} parent=11 // pred_region
          _
        $region20: #{distil_bert_lstm_forward.13} parent=11 // pred_fallthru
          _
      $region12: #{distil_bert_lstm_forward.13} parent=5 // pred_fallthru
        _
      %p147 = scmp.lt.s32.totalorder %s11, 8
      // Predicated region
      $region21: #{distil_bert_lstm_forward.13} parent=5 // pred_check
        %p148 = pneg %p147
      $region22: #{distil_bert_lstm_forward.13} parent=5 // pred_check_branch
        %150 = sbr.rel (%p148) target = $region24
      $region23: #{distil_bert_lstm_forward.13} parent=5 // pred_region
        // Predicated region
        $region25: #{distil_bert_lstm_forward.13} parent=23 // pred_check
          %p151 = pneg %p31
        $region26: #{distil_bert_lstm_forward.13} parent=23 // pred_check_branch
          %153 = sbr.rel (%p151) target = $region28
        $region27: #{distil_bert_lstm_forward.13} parent=23 // pred_region
          %p154 = scmp.lt.s32.totalorder %s11, 7
          %s155 = scalar_select %p154, %s11, 7
          %s156 = smul.addr %s155, 2
          %s157 = scalar_lea.vmem %s0, %s156
        $region28: #{distil_bert_lstm_forward.13} parent=23 // pred_fallthru
          _
        // Predicated region
        $region29: #{distil_bert_lstm_forward.13} parent=23 // pred_check
          %p158 = pneg %p78
        $region30: #{distil_bert_lstm_forward.13} parent=23 // pred_check_branch
          %160 = sbr.rel (%p158) target = $region32
        $region31: #{distil_bert_lstm_forward.13} parent=23 // pred_region
          %s161 = smul.u32 4, %s11
          %p162 = scmp.lt.s32.totalorder %s161, 31
          %s163 = scalar_select %p162, %s161, 31
          %s164 = smul.addr %s163, 4
          %s165 = scalar_lea.vmem %s2, %s164
          %s166 = smul.u32 4, %s11
        $region32: #{distil_bert_lstm_forward.13} parent=23 // pred_fallthru
          _
      $region24: #{distil_bert_lstm_forward.13} parent=5 // pred_fallthru
        _
      %p167 = scmp.le.s32.totalorder 1, %s11
      %p168 = scmp.lt.s32.totalorder %s11, 9
      %p169 = pnand %p167, %p168
      %p170 = pneg %p169
      // Predicated region
      $region33: #{distil_bert_lstm_forward.13} parent=5 // pred_check
        _
      $region34: #{distil_bert_lstm_forward.13} parent=5 // pred_check_branch
        %172 = sbr.rel (%p169) target = $region36
      $region35: #{distil_bert_lstm_forward.13} parent=5 // pred_region
        %s173 = ssub.s32 %s11, 1
        %p174 = scmp.lt.s32.totalorder %s16, 7
        %s175 = scalar_select %p174, %s16, 7
        %s176 = smul.addr %s175, 2
        %s177 = scalar_lea.vmem %s0, %s176
        %p178 = pneg %p37
        %p179 = pneg %p34
        %p180 = pneg %p58
        %p181 = pneg %p55
        %s182 = smul.u32 4, %s16
        %p183 = scmp.lt.s32.totalorder %s182, 31
        %s184 = scalar_select %p183, %s182, 31
        %s185 = smul.addr %s184, 4
        %s186 = scalar_lea.vmem %s2, %s185
        %p187 = pneg %p84
        %p188 = pneg %p81
        %p189 = pneg %p105
        %p190 = pneg %p102
        %p191 = pneg %p126
        %p192 = pneg %p123
        %p193 = scmp.lt.s32.totalorder %s16, 7
        %s194 = scalar_select %p193, %s16, 7
        %s195 = smul.addr %s194, 2
        %s196 = scalar_lea.vmem %s0, %s195
        %s197 = smul.u32 4, %s16
        %p198 = scmp.lt.s32.totalorder %s197, 31
        %s199 = scalar_select %p198, %s197, 31
        %s200 = smul.addr %s199, 4
        %s201 = scalar_lea.vmem %s2, %s200
        %s202 = smul.u32 4, %s16
        %p204 = scmp.eq.s32.totalorder %s16, 0
        // Predicated region
        $region37: #{distil_bert_lstm_forward.13} parent=35 // pred_check
          %p205 = pneg %p204
        $region38: #{distil_bert_lstm_forward.13} parent=35 // pred_check_branch
          %207 = sbr.rel (%p205) target = $region40
        $region39: #{distil_bert_lstm_forward.13} parent=35 // pred_region
          %vm208 = vcmask 254976
          %209 = vst.msk [vmem:[#allocation2] sm:$0x3] %vm208, 0.0
          %210 = vst.msk [vmem:[#allocation3] sm:$0x3] %vm208, 0.0
          %vm211 = vcmask 17408
          %212 = vst.msk [vmem:[#allocation4] sm:$0x3] %vm211, 0.0
        $region40: #{distil_bert_lstm_forward.13} parent=35 // pred_fallthru
          _
        %v213 = vld [vmem:[%s196] sm:$0x3]
        %v214 = vld [vmem:[#allocation2] sm:$0x3]
        %v215 = vpack.c.bf16 %v214, %v214
        %v216 = vld [vmem:[%s1] sm:$0xf]
        %v217 = vld [vmem:[%s1 + $0x4] sm:$0xf]
        %v218 = vld [vmem:[%s1 + $0x8] sm:$0xf]
        %v219 = vld [vmem:[%s1 + $0xc] sm:$0xf]
        %v224 = vunpack.c.l.b16 %v216
        %v225 = vunpack.c.l.b16 %v217
        %v226 = vunpack.c.l.b16 %v218
        %v227 = vunpack.c.l.b16 %v219
        %v228 = vpack.c.b16 %v225, %v224
        %v229 = vpack.c.b16 %v227, %v226
        %vm232 = vcmask 261120
        %v234 = vsel %vm232, %v215, 0
        %236 = vmatpush.bf16.msra.mxu0 0
        %237 = vmatpush.bf16.msra.mxu0 0
        %238 = vmatpush.bf16.msra.mxu0 0
        %239 = vmatpush.bf16.msra.mxu0 0
        %240 = vmatpush.bf16.msra.mxu0 0
        %241 = vmatpush.bf16.msra.mxu0 0
        %242 = vmatpush.bf16.msra.mxu0 %v229
        %243 = vmatpush.bf16.msra.mxu0 %v228
        %244 = vmatmul.bf16.gmra.mxu0 %v234
        %v245 = vpop.f32.mrf.mxu0
        %v246 = vadd.f32 0.0, %v245
        %v247 = vpop.f32.mrf.mxu0
        %248 = vdwg.mxu0
        %v249 = vadd.f32 %v213, %v246
        %v250 = vxor.u32 %v249, 2147483648
        %v251 = vmul.f32 %v250, 1.442695
        %v252 = vpow.pop %v251
        %v253 = vadd.f32 %v252, 1.0
        %v254 = vrcp.pop %v253
        %v255 = vmul.f32 %v253, %v254
        %v256 = vsub.f32 1.0, %v255
        %v257 = vmul.f32 %v254, %v256
        %v258 = vadd.f32 %v254, %v257
        %vm259 = vweird.f32 %v253
        %vm260 = vweird.f32 %v254
        %vm261 = vmor %vm259, %vm260
        %v262 = vsel %vm261, %v254, %v258
        %v263 = vand.u32 2147483647, %v253
        %vm264 = vcmp.eq.f32.partialorder %v263, 8.507059e+37
        %v265 = vand.u32 %v253, 2147483648
        %v266 = vor.u32 1.1754944e-38, %v265
        %v267 = vsel %vm264, %v266, %v262
        %v268 = vmul.f32 1.0, %v267
        %v269 = vtanh.pop %v249
        %v270 = vld [vmem:[#allocation3] sm:$0x3]
        %272 = vrot.lane.b32.xlu0 %v270, 32
        %v273 = vpop.permute.xlu0 %272
        %v275 = vmul.f32 %v268, %v273
        %277 = vrot.lane.b32.xlu0 %v269, 64
        %v278 = vpop.permute.xlu0 %277
        %v280 = vmul.f32 %v268, %v278
        %282 = vrot.lane.b32.xlu0 %v280, 32
        %v283 = vpop.permute.xlu0 %282
        %v285 = vadd.f32 %v275, %v283
        %v286 = vtanh.pop %v285
        %288 = vrot.lane.b32.xlu0 %v286, 64
        %v289 = vpop.permute.xlu0 %288
        %v291 = vmul.f32 %v268, %v289
        %293 = vrot.lane.b32.xlu0 %v285, 96
        %v294 = vpop.permute.xlu0 %293
        %vm296 = vcmask 254976
        %297 = vst.msk [vmem:[#allocation3] sm:$0x3] %vm296, %v294
        %299 = vrot.lane.b32.xlu0 %v291, 32
        %v300 = vpop.permute.xlu0 %299
        %302 = vst.msk [vmem:[#allocation2] sm:$0x3] %vm296, %v300
        %v303 = vld [vmem:[#allocation4] sm:$0x3]
        %v304 = vpack.c.bf16 %v291, %v291
        %v305 = vld [vmem:[%s201] sm:$0xf]
        %v306 = vld [vmem:[%s201 + $0x4] sm:$0xf]
        %v307 = vld [vmem:[%s201 + $0x8] sm:$0xf]
        %v308 = vld [vmem:[%s201 + $0xc] sm:$0xf]
        %310 = vrot.lane.b32.xlu0 %v304, 32
        %v311 = vpop.permute.xlu0 %310
        %v316 = vunpack.c.l.b16 %v305
        %v317 = vunpack.c.l.b16 %v306
        %v318 = vunpack.c.l.b16 %v307
        %v319 = vunpack.c.l.b16 %v308
        %v320 = vpack.c.b16 %v317, %v316
        %v321 = vpack.c.b16 %v319, %v318
        %v325 = vsel %vm232, %v311, 0
        %327 = vmatpush.bf16.msra.mxu0 0
        %328 = vmatpush.bf16.msra.mxu0 0
        %329 = vmatpush.bf16.msra.mxu0 0
        %330 = vmatpush.bf16.msra.mxu0 0
        %331 = vmatpush.bf16.msra.mxu0 0
        %332 = vmatpush.bf16.msra.mxu0 0
        %333 = vmatpush.bf16.msra.mxu0 %v321
        %334 = vmatpush.bf16.msra.mxu0 %v320
        %335 = vmatmul.bf16.gmra.mxu0 %v325
        %v336 = vpop.f32.mrf.mxu0
        %v337 = vadd.f32 0.0, %v336
        %v338 = vpop.f32.mrf.mxu0
        %339 = vdwg.mxu0
        %v340 = vadd.f32 %v303, %v337
        %vm341 = vcmask 17408
        %342 = vst.msk [vmem:[#allocation4] sm:$0x3] %vm341, %v340
        %p343 = scmp.eq.s32.totalorder %s16, 7
        // Predicated region
        $region41: #{distil_bert_lstm_forward.13} parent=35 // pred_check
          %p344 = pneg %p343
        $region42: #{distil_bert_lstm_forward.13} parent=35 // pred_check_branch
          %346 = sbr.rel (%p344) target = $region44
        $region43: #{distil_bert_lstm_forward.13} parent=35 // pred_region
          %v347 = vld [vmem:[#allocation4] sm:$0x3]
          %v348 = vld [vmem:[%s3] sm:$0x1]
          %v350 = vperm.slane %v348, 0
          %v352 = vadd.f32 %v347, %v350
          %353 = vst.msk [vmem:[#allocation5] sm:$0x3] %vm341, %v352
        $region44: #{distil_bert_lstm_forward.13} parent=35 // pred_fallthru
          _
        // Predicated region
        $region45: #{distil_bert_lstm_forward.13} parent=35 // pred_check
          %p354 = pneg %p123
        $region46: #{distil_bert_lstm_forward.13} parent=35 // pred_check_branch
          %356 = sbr.rel (%p354) target = $region48
        $region47: #{distil_bert_lstm_forward.13} parent=35 // pred_region
          %358 = vsyncadd [#allocation6], 0
          %s360 = sshll.u32 [#allocation5], 4
          %s361 = int_to_ptr.vmem [resolvable:$true] %s360
          %s362 = sshll.u32 %s4, 4
          %s363 = int_to_ptr.hbm [resolvable:$true] %s362
          %365 = dma.vmem_to_hbm [thread:$0]  %s361, 32, %s363, [#allocation6]
        $region48: #{distil_bert_lstm_forward.13} parent=35 // pred_fallthru
          _
        // Predicated region
        $region49: #{distil_bert_lstm_forward.13} parent=35 // pred_check
          %p366 = pneg %p123
        $region50: #{distil_bert_lstm_forward.13} parent=35 // pred_check_branch
          %368 = sbr.rel (%p366) target = $region52
        $region51: #{distil_bert_lstm_forward.13} parent=35 // pred_region
          %370 = dma.done [#allocation6], 32
        $region52: #{distil_bert_lstm_forward.13} parent=35 // pred_fallthru
          _
      $region36: #{distil_bert_lstm_forward.13} parent=5 // pred_fallthru
        _
      %p371 = scmp.le.s32.totalorder 2, %s11
      // Predicated region
      $region53: #{distil_bert_lstm_forward.13} parent=5 // pred_check
        %p372 = pneg %p371
      $region54: #{distil_bert_lstm_forward.13} parent=5 // pred_check_branch
        %374 = sbr.rel (%p372) target = $region56
      $region55: #{distil_bert_lstm_forward.13} parent=5 // pred_region
        %s375 = ssub.s32 %s11, 2
      $region56: #{distil_bert_lstm_forward.13} parent=5 // pred_fallthru
        _
    $region6: #{distil_bert_lstm_forward.13} parent=1 // loop_footer
      %s15 = sadd.s32 1, %s11
    $region7: #{distil_bert_lstm_forward.13} parent=1 // loop_footer_branch
      %10 = sbr.rel target = $region3
    $region8: #{distil_bert_lstm_forward.13} parent=1 // loop_exit
      _
    %376 = vsyncpa [#allocation6], 1
    %s377 = scalar_lea.sflag [#allocation6], 1
    %378 = vsyncpa %s377, 1

</llo_original>
